<compile_context>
chip_gen: v6e
topology: v6e:2x2x1
jax: 0.10.0
libtpu: 0.0.40
codegen_flags: <defaults>
</compile_context>

<pallas_src>
import functools
import math

import numpy as np
import jax
import jax.numpy as jnp
from jax.experimental import pallas as pl
from jax.experimental.pallas import tpu as pltpu


# ----------------------------------------------------------------------------
# In-kernel helpers (traced inside Pallas kernels)
# ----------------------------------------------------------------------------
def _layernorm(x, g, b, eps):
    mean = jnp.mean(x, axis=-1, keepdims=True)
    var = jnp.mean((x - mean) ** 2, axis=-1, keepdims=True)
    return (x - mean) * jax.lax.rsqrt(var + eps) * g + b


def _softmax_rows(s):
    m = jnp.max(s, axis=-1, keepdims=True)
    p = jnp.exp(s - m)
    return p * pl.reciprocal(jnp.sum(p, axis=-1, keepdims=True), approx=True)


def _qkt(a, b):
    """[M, d] x [N, d] -> [M, N] contracting last dims (no K transpose)."""
    return jax.lax.dot_general(a, b, dimension_numbers=(((1,), (1,)), ((), ())),
                               preferred_element_type=jnp.float32)


def _wdot(x_bf16, w_bf16, bias_f32):
    """Weight matmul: bf16 operands on the MXU, f32 accumulation, + bias."""
    return jnp.dot(x_bf16, w_bf16, preferred_element_type=jnp.float32) + bias_f32


# ----------------------------------------------------------------------------
# Fused Pallas kernels (one per pass)
# ----------------------------------------------------------------------------
def _encoder_pass_kernel(x_ref, bias_ref, wqkv_ref, wo_ref, w1_ref, w2_ref,
                         vecs_ref, ckvw_ref, ckvb_ref, ckv_ref,
                         *, nx, dk, d_ff, scale, eps):
    D = x_ref.shape[-1]
    x = x_ref[...]                        # [B*L, D] f32
    attn_bias = bias_ref[...]             # [B*L, B*L] block-diagonal bias

    for i in range(nx):                   # unrolled; all weights resident in VMEM
        vec = vecs_ref[i]                 # [8, W] packed biases / LN params
        bqkv, bo = vec[0:1, :3 * dk], vec[1:2, :D]
        g1, be1 = vec[2:3, :D], vec[3:4, :D]
        bf1, bf2 = vec[4:5, :d_ff], vec[5:6, :D]
        g2, be2 = vec[6:7, :D], vec[7:8, :D]

        # fused QKV projection (single MXU call)
        qkv = _wdot(x.astype(jnp.bfloat16), wqkv_ref[i], bqkv)      # [BL, 3dk]
        q, k, v = qkv[:, :dk], qkv[:, dk:2 * dk], qkv[:, 2 * dk:]
        s = _qkt(q, k) * scale + attn_bias
        att = jnp.dot(_softmax_rows(s), v, preferred_element_type=jnp.float32)
        # output projection + residual + LayerNorm 1
        h = _layernorm(_wdot(att.astype(jnp.bfloat16), wo_ref[i], bo) + x,
                       g1, be1, eps)
        # FFN + residual + LayerNorm 2
        f = jnp.maximum(_wdot(h.astype(jnp.bfloat16), w1_ref[i], bf1), 0.0)
        f = _wdot(f.astype(jnp.bfloat16), w2_ref[i], bf2)
        x = _layernorm(f + h, g2, be2, eps)

    # cross-attention K/V for ALL decoder layers in one MXU call.
    ckv_ref[...] = _wdot(x.astype(jnp.bfloat16), ckvw_ref[...],
                         ckvb_ref[...]).astype(ckv_ref.dtype)


def _decoder_pass_kernel(x_ref, ckv_ref, sbias_ref, xbias_ref,
                         sa_wqkv_ref, sa_wo_ref, ca_wq_ref, ca_wo_ref,
                         w1_ref, w2_ref, vecs_ref, y_ref,
                         *, nx, dk, d_ff, scale, eps):
    D = x_ref.shape[-1]
    x = x_ref[...]                        # [B*L, D] f32
    ckv = ckv_ref[...]                    # [B*L, nx*2*dk] cached cross K/V
    sbias = sbias_ref[...]                # block-diag + causal bias
    xbias = xbias_ref[...]                # block-diag bias (cross attention)

    for i in range(nx):
        vec = vecs_ref[i]                 # [12, W]
        sa_bqkv, sa_bo = vec[0:1, :3 * dk], vec[1:2, :D]
        g1, be1 = vec[2:3, :D], vec[3:4, :D]
        ca_bq, ca_bo = vec[4:5, :dk], vec[5:6, :D]
        g2, be2 = vec[6:7, :D], vec[7:8, :D]
        bf1, bf2 = vec[8:9, :d_ff], vec[9:10, :D]
        g3, be3 = vec[10:11, :D], vec[11:12, :D]

        # ---- masked self-attention ----
        qkv = _wdot(x.astype(jnp.bfloat16), sa_wqkv_ref[i], sa_bqkv)
        q, k, v = qkv[:, :dk], qkv[:, dk:2 * dk], qkv[:, 2 * dk:]
        s = _qkt(q, k) * scale + sbias
        att = jnp.dot(_softmax_rows(s), v, preferred_element_type=jnp.float32)
        h1 = _layernorm(_wdot(att.astype(jnp.bfloat16), sa_wo_ref[i], sa_bo) + x,
                        g1, be1, eps)

        # ---- cross-attention (K/V computed once from encoder output) ----
        ck = ckv[:, 2 * dk * i:2 * dk * i + dk]
        cv = ckv[:, 2 * dk * i + dk:2 * dk * (i + 1)]
        cq = _wdot(h1.astype(jnp.bfloat16), ca_wq_ref[i], ca_bq)
        cs = _qkt(cq, ck) * scale + xbias
        catt = jnp.dot(_softmax_rows(cs), cv, preferred_element_type=jnp.float32)
        h2 = _layernorm(_wdot(catt.astype(jnp.bfloat16), ca_wo_ref[i], ca_bo) + h1,
                        g2, be2, eps)

        # ---- FFN ----
        f = jnp.maximum(_wdot(h2.astype(jnp.bfloat16), w1_ref[i], bf1), 0.0)
        f = _wdot(f.astype(jnp.bfloat16), w2_ref[i], bf2)
        x = _layernorm(f + h2, g3, be3, eps)

    y_ref[...] = x.astype(y_ref.dtype)


def _linear_kernel(x_ref, w_ref, b_ref, o_ref):
    o_ref[...] = (jnp.dot(x_ref[...].astype(jnp.bfloat16), w_ref[...],
                          preferred_element_type=jnp.float32)
                  + b_ref[...]).astype(o_ref.dtype)


# ----------------------------------------------------------------------------
# pallas_call wrappers (no grid: whole arrays resident in VMEM)
# ----------------------------------------------------------------------------
def _vmem():
    return pl.BlockSpec(memory_space=pltpu.MemorySpace.VMEM)


def encoder_pass(x2d, bias, p, *, nx, dk, d_ff, eps=1e-5):
    BL, _ = x2d.shape
    kern = functools.partial(_encoder_pass_kernel, nx=nx, dk=dk, d_ff=d_ff,
                             scale=1.0 / math.sqrt(dk), eps=eps)
    return pl.pallas_call(
        kern,
        out_shape=jax.ShapeDtypeStruct((BL, nx * 2 * dk), jnp.float32),
        in_specs=[_vmem()] * 9,
        out_specs=_vmem(),
    )(x2d, bias, p["wqkv"], p["wo"], p["w1"], p["w2"], p["vecs"],
      p["ca_wkv"], p["ca_bkv"])


def decoder_pass(x2d, ckv, sbias, xbias, p, *, nx, dk, d_ff, eps=1e-5):
    BL, D = x2d.shape
    kern = functools.partial(_decoder_pass_kernel, nx=nx, dk=dk, d_ff=d_ff,
                             scale=1.0 / math.sqrt(dk), eps=eps)
    return pl.pallas_call(
        kern,
        out_shape=jax.ShapeDtypeStruct((BL, D), jnp.float32),
        in_specs=[_vmem()] * 11,
        out_specs=_vmem(),
    )(x2d, ckv, sbias, xbias, p["sa_wqkv"], p["sa_wo"], p["ca_wq"], p["ca_wo"],
      p["w1"], p["w2"], p["vecs"])


def linear(x, w, b):
    M, _ = x.shape
    N = w.shape[1]
    return pl.pallas_call(
        _linear_kernel,
        out_shape=jax.ShapeDtypeStruct((M, N), jnp.float32),
        in_specs=[_vmem()] * 3,
        out_specs=_vmem(),
    )(x, w, b)


# ----------------------------------------------------------------------------
# Attention-bias masks for folded-batch attention (trace-time numpy constants)
# ----------------------------------------------------------------------------
def _attn_biases(n_batch, L):
    bid = np.repeat(np.arange(n_batch), L)
    pos = np.tile(np.arange(L), n_batch)
    same = bid[:, None] == bid[None, :]
    causal = pos[:, None] >= pos[None, :]
    block = np.where(same, 0.0, -1e9).astype(np.float32)
    block_causal = np.where(same & causal, 0.0, -1e9).astype(np.float32)
    return jnp.asarray(block), jnp.asarray(block_causal)


# ----------------------------------------------------------------------------
# Parameter init (deterministic, synthetic; weights stacked / packed / bf16)
# ----------------------------------------------------------------------------
def _pack_rows(width, *rows):
    slab = np.zeros((len(rows), width), np.float32)
    for r, v in enumerate(rows):
        v = np.asarray(v, np.float32).reshape(-1)
        slab[r, :v.shape[0]] = v
    return slab


def init_params(key, d_model, dk, d_ff, num_token, max_len, nx):
    W = max(d_model, 3 * dk, d_ff)                     # packed-slab lane width
    keys = iter(jax.random.split(key, 16 * nx + 8))

    def dense(fan_in, fan_out):
        w = np.asarray(jax.random.normal(next(keys), (fan_in, fan_out),
                                         jnp.float32)) * 0.02
        b = np.zeros((fan_out,), np.float32)
        return w, b

    ones_d = np.ones((d_model,), np.float32)
    zeros_d = np.zeros((d_model,), np.float32)

    # embedding (padding_idx = 0) + sinusoidal positional encoding
    emb = np.asarray(jax.random.normal(next(keys), (num_token, d_model),
                                       jnp.float32)) * 0.02
    emb[0] = 0.0
    pe = np.zeros((max_len, d_model), np.float32)
    pos = np.arange(max_len, dtype=np.float32)[:, None]
    div = np.exp(np.arange(0, d_model, 2, dtype=np.float32)
                 * (-math.log(10000.0) / d_model))
    pe[:, 0::2] = np.sin(pos * div)
    pe[:, 1::2] = np.cos(pos * div)

    enc = {k: [] for k in ("wqkv", "wo", "w1", "w2", "vecs")}
    dec = {k: [] for k in ("sa_wqkv", "sa_wo", "ca_wq", "ca_wo", "w1", "w2", "vecs")}
    ca_wkv_cols, ca_bkv_cols = [], []

    for _ in range(nx):                                # encoder layers
        wq, bq = dense(d_model, dk); wk, bk = dense(d_model, dk)
        wv, bv = dense(d_model, dk); wo, bo = dense(dk, d_model)
        w1, b1 = dense(d_model, d_ff); w2, b2 = dense(d_ff, d_model)
        enc["wqkv"].append(np.concatenate([wq, wk, wv], axis=1))
        enc["wo"].append(wo); enc["w1"].append(w1); enc["w2"].append(w2)
        enc["vecs"].append(_pack_rows(
            W, np.concatenate([bq, bk, bv]), bo, ones_d, zeros_d, b1, b2,
            ones_d, zeros_d))

    for _ in range(nx):                                # decoder layers
        wq, bq = dense(d_model, dk); wk, bk = dense(d_model, dk)
        wv, bv = dense(d_model, dk); wo, bo = dense(dk, d_model)
        cwq, cbq = dense(d_model, dk); cwk, cbk = dense(d_model, dk)
        cwv, cbv = dense(d_model, dk); cwo, cbo = dense(dk, d_model)
        w1, b1 = dense(d_model, d_ff); w2, b2 = dense(d_ff, d_model)
        dec["sa_wqkv"].append(np.concatenate([wq, wk, wv], axis=1))
        dec["sa_wo"].append(wo)
        dec["ca_wq"].append(cwq); dec["ca_wo"].append(cwo)
        dec["w1"].append(w1); dec["w2"].append(w2)
        dec["vecs"].append(_pack_rows(
            W, np.concatenate([bq, bk, bv]), bo, ones_d, zeros_d,
            cbq, cbo, ones_d, zeros_d, b1, b2, ones_d, zeros_d))
        ca_wkv_cols.append(np.concatenate([cwk, cwv], axis=1))   # [D, 2*dk]
        ca_bkv_cols.append(np.concatenate([cbk, cbv]))           # [2*dk]

    def stack_bf16(lst):
        return jnp.asarray(np.stack(lst)).astype(jnp.bfloat16)

    enc_p = dict(
        wqkv=stack_bf16(enc["wqkv"]), wo=stack_bf16(enc["wo"]),
        w1=stack_bf16(enc["w1"]), w2=stack_bf16(enc["w2"]),
        vecs=jnp.asarray(np.stack(enc["vecs"])),
        # cross-attn K/V weights for ALL decoder layers, fused along N
        ca_wkv=jnp.asarray(np.concatenate(ca_wkv_cols, axis=1)).astype(jnp.bfloat16),
        ca_bkv=jnp.asarray(np.concatenate(ca_bkv_cols)[None, :]),
    )
    dec_p = dict(
        sa_wqkv=stack_bf16(dec["sa_wqkv"]), sa_wo=stack_bf16(dec["sa_wo"]),
        ca_wq=stack_bf16(dec["ca_wq"]), ca_wo=stack_bf16(dec["ca_wo"]),
        w1=stack_bf16(dec["w1"]), w2=stack_bf16(dec["w2"]),
        vecs=jnp.asarray(np.stack(dec["vecs"])),
    )

    w_last, b_last = dense(d_model * max_len, num_token)
    return dict(embedding=jnp.asarray(emb), pos_enc=jnp.asarray(pe),
                enc=enc_p, dec=dec_p,
                w_last=jnp.asarray(w_last).astype(jnp.bfloat16),
                b_last=jnp.asarray(b_last[None, :]))


# ----------------------------------------------------------------------------
# Transformer forward (jitted encode / decode built ONCE per model)
# ----------------------------------------------------------------------------
def make_transformer(params, cfg):
    B, L, D = cfg["batch_size"], cfg["max_len"], cfg["d_model"]
    dk, nx, d_ff = cfg["dk_model"], cfg["NX"], cfg["d_ff"]
    num_token, stop_token = cfg["num_token"], cfg["stop_token"]

    def embed_and_pos(tokens):
        emb = jnp.take(params["embedding"], tokens, axis=0)       # [n, L, D]
        return emb + params["pos_enc"][None, :L, :]

    @jax.jit
    def encode(enc_tokens):
        n = enc_tokens.shape[0]
        x = embed_and_pos(enc_tokens).reshape(n * L, D)
        block_bias, _ = _attn_biases(n, L)
        # whole encoder stack + cross-KV projection: one pallas_call
        return encoder_pass(x, block_bias, params["enc"], nx=nx, dk=dk, d_ff=d_ff)

    @jax.jit
    def decode(dec_tokens, ckv):
        n = dec_tokens.shape[0]
        x = embed_and_pos(dec_tokens).reshape(n * L, D)
        xbias, sbias = _attn_biases(n, L)
        # whole decoder stack: one pallas_call
        y = decoder_pass(x, ckv, sbias, xbias, params["dec"],
                         nx=nx, dk=dk, d_ff=d_ff)                 # [n*L, D]
        flat = y.reshape(n, L * D)                                # Flatten(-2,-1)
        return linear(flat, params["w_last"], params["b_last"])   # [n, num_token]

    def forward(input_encoder, input_decoder, targets_decoder=None):
        ckv = encode(jnp.asarray(input_encoder))                  # [B*L, nx*2dk]

        if targets_decoder is not None:
            # Teacher-forced path: decoder inputs depend only on targets, so the
            # host loop is eliminated.  Determine the stop-token break step once
            # and run ALL steps as a single batched decode (steps folded into
            # batch) -> no per-step host<->device syncs or dispatches.
            tgt = np.asarray(targets_decoder)
            dec0 = np.asarray(input_decoder)
            stops = np.cumsum((tgt[:, :L - 1] == stop_token).sum(axis=0))
            hit = np.nonzero(stops == B)[0]
            n_steps = int(hit[0]) + 1 if hit.size else L - 1
            dec_inputs = np.tile(dec0[None], (n_steps, 1, 1))
            for i in range(1, n_steps):
                dec_inputs[i, :, 1:i + 1] = tgt[:, :i]
            ckv_rep = jnp.tile(ckv.reshape(B, L, -1),
                               (n_steps, 1, 1)).reshape(n_steps * B * L, -1)
            logits = decode(jnp.asarray(dec_inputs.reshape(n_steps * B, L)),
                            ckv_rep)                              # [n_steps*B, T]
            return logits.reshape(n_steps, B, num_token).transpose(1, 0, 2)

        # Greedy path: tokens stay on device; only the argmax scalar is pulled
        # to host for the stop check.  Mirrors torch `pred.item()` (meaningful
        # for batch_size == 1, like the reference).
        dec = jnp.asarray(input_decoder)
        outputs = []
        for i in range(L - 1):
            logits = decode(dec, ckv)
            outputs.append(logits)
            pred = int(jnp.argmax(jax.nn.softmax(logits, axis=-1)[0]))
            if pred == stop_token:
                break
            dec = dec.at[:, i + 1].set(pred)
        return jnp.stack(outputs, axis=0).transpose(1, 0, 2)

    return forward


# ----------------------------------------------------------------------------
# Main
# ----------------------------------------------------------------------------
if __name__ == "__main__":
    cfg = dict(
        batch_size=2,
        NX=2,
        max_len=8 + 2,        # max_len_sentence + 2
        stop_token=2,
        d_model=32,
        dk_model=16,
        d_ff=64,
        num_token=16,
    )

    key = jax.random.PRNGKey(0)
    kp, ke, kt = jax.random.split(key, 3)
    params = init_params(kp, cfg["d_model"], cfg["dk_model"], cfg["d_ff"],
                         cfg["num_token"], cfg["max_len"], cfg["NX"])

    B, L = cfg["batch_size"], cfg["max_len"]
    input_encoder = jax.random.randint(ke, (B, L), 1, cfg["num_token"],
                                       dtype=jnp.int32)
    input_decoder = jnp.zeros((B, L), jnp.int32).at[:, 0].set(1)
    targets_decoder = np.array(
        jax.random.randint(kt, (B, L - 1), 3, cfg["num_token"]), dtype=np.int32)
    targets_decoder[:, -2] = cfg["stop_token"]    # exercise the early-break path

    forward = make_transformer(params, cfg)       # built & jitted once, reused
    out = forward(input_encoder, input_decoder, targets_decoder=targets_decoder)
    out = jax.block_until_ready(out)

    assert out.ndim == 3 and out.shape[0] == B and out.shape[2] == cfg["num_token"]
    assert bool(jnp.all(jnp.isfinite(out)))
    print("KERNEL_OK")
</pallas_src>

<mosaic_0001>
module attributes {stable_mosaic.version = 11 : i64} {
  func.func @_encoder_pass_kernel(%arg0: memref<20x32xf32, #tpu.memory_space<vmem>>, %arg1: memref<20x20xf32, #tpu.memory_space<vmem>>, %arg2: memref<2x32x48xbf16, #tpu.memory_space<vmem>>, %arg3: memref<2x16x32xbf16, #tpu.memory_space<vmem>>, %arg4: memref<2x32x64xbf16, #tpu.memory_space<vmem>>, %arg5: memref<2x64x32xbf16, #tpu.memory_space<vmem>>, %arg6: memref<2x8x64xf32, #tpu.memory_space<vmem>>, %arg7: memref<32x64xbf16, #tpu.memory_space<vmem>>, %arg8: memref<1x64xf32, #tpu.memory_space<vmem>>, %arg9: memref<20x64xf32, #tpu.memory_space<vmem>>) attributes {dimension_semantics = [], scalar_prefetch = 0 : i64, scratch_operands = 0 : i64, tpu.core_type = #tpu.core_type<tc>} {
    %c0 = arith.constant 0 : index
    %c0_0 = arith.constant 0 : index
    %0 = vector.load %arg0[%c0, %c0_0] : memref<20x32xf32, #tpu.memory_space<vmem>>, vector<20x32xf32>
    %c0_1 = arith.constant 0 : index
    %c0_2 = arith.constant 0 : index
    %1 = vector.load %arg1[%c0_1, %c0_2] : memref<20x20xf32, #tpu.memory_space<vmem>>, vector<20x20xf32>
    %c0_3 = arith.constant 0 : index
    %c0_4 = arith.constant 0 : index
    %c0_5 = arith.constant 0 : index
    %2 = vector.load %arg6[%c0_3, %c0_4, %c0_5] : memref<2x8x64xf32, #tpu.memory_space<vmem>>, vector<1x8x64xf32>
    %3 = vector.shape_cast %2 : vector<1x8x64xf32> to vector<8x64xf32>
    %4 = vector.extract_strided_slice %3 {offsets = [0, 0], sizes = [1, 48], strides = [1, 1]} : vector<8x64xf32> to vector<1x48xf32>
    %5 = vector.extract_strided_slice %3 {offsets = [1, 0], sizes = [1, 32], strides = [1, 1]} : vector<8x64xf32> to vector<1x32xf32>
    %6 = vector.extract_strided_slice %3 {offsets = [2, 0], sizes = [1, 32], strides = [1, 1]} : vector<8x64xf32> to vector<1x32xf32>
    %7 = vector.extract_strided_slice %3 {offsets = [3, 0], sizes = [1, 32], strides = [1, 1]} : vector<8x64xf32> to vector<1x32xf32>
    %8 = vector.extract_strided_slice %3 {offsets = [4, 0], sizes = [1, 64], strides = [1, 1]} : vector<8x64xf32> to vector<1x64xf32>
    %9 = vector.extract_strided_slice %3 {offsets = [5, 0], sizes = [1, 32], strides = [1, 1]} : vector<8x64xf32> to vector<1x32xf32>
    %10 = vector.extract_strided_slice %3 {offsets = [6, 0], sizes = [1, 32], strides = [1, 1]} : vector<8x64xf32> to vector<1x32xf32>
    %11 = vector.extract_strided_slice %3 {offsets = [7, 0], sizes = [1, 32], strides = [1, 1]} : vector<8x64xf32> to vector<1x32xf32>
    %12 = arith.truncf %0 : vector<20x32xf32> to vector<20x32xbf16>
    %c0_6 = arith.constant 0 : index
    %c0_7 = arith.constant 0 : index
    %c0_8 = arith.constant 0 : index
    %13 = vector.load %arg2[%c0_6, %c0_7, %c0_8] : memref<2x32x48xbf16, #tpu.memory_space<vmem>>, vector<1x32x48xbf16>
    %14 = vector.shape_cast %13 : vector<1x32x48xbf16> to vector<32x48xbf16>
    %cst = arith.constant dense<0.000000e+00> : vector<20x48xf32>
    %15 = tpu.matmul %12, %14, %cst {dimension_numbers = #tpu.dot_dimension_numbers<[1], [0], [0], [1], [0, 0, 1, 1], [], []>} : vector<20x32xbf16>, vector<32x48xbf16>, vector<20x48xf32> -> vector<20x48xf32>
    %16 = vector.broadcast %4 : vector<1x48xf32> to vector<20x48xf32>
    %17 = arith.addf %15, %16 : vector<20x48xf32>
    %18 = vector.extract_strided_slice %17 {offsets = [0, 0], sizes = [20, 16], strides = [1, 1]} : vector<20x48xf32> to vector<20x16xf32>
    %19 = vector.extract_strided_slice %17 {offsets = [0, 16], sizes = [20, 16], strides = [1, 1]} : vector<20x48xf32> to vector<20x16xf32>
    %20 = vector.extract_strided_slice %17 {offsets = [0, 32], sizes = [20, 16], strides = [1, 1]} : vector<20x48xf32> to vector<20x16xf32>
    %cst_9 = arith.constant dense<0.000000e+00> : vector<20x20xf32>
    %21 = tpu.matmul %18, %19, %cst_9 {dimension_numbers = #tpu.dot_dimension_numbers<[1], [1], [0], [0], [0, 0, 1, 0], [], []>} : vector<20x16xf32>, vector<20x16xf32>, vector<20x20xf32> -> vector<20x20xf32>
    %cst_10 = arith.constant 2.500000e-01 : f32
    %22 = vector.broadcast %cst_10 : f32 to vector<20x20xf32>
    %23 = arith.mulf %21, %22 : vector<20x20xf32>
    %24 = arith.addf %23, %1 : vector<20x20xf32>
    %cst_11 = arith.constant dense<0xFF800000> : vector<20xf32>
    %25 = vector.multi_reduction <maximumf>, %24, %cst_11 [1] : vector<20x20xf32> to vector<20xf32>
    %26 = vector.shape_cast %25 : vector<20xf32> to vector<20x1xf32>
    %27 = vector.broadcast %26 : vector<20x1xf32> to vector<20x20xf32>
    %28 = arith.subf %24, %27 : vector<20x20xf32>
    %29 = math.exp %28 : vector<20x20xf32>
    %cst_12 = arith.constant dense<0.000000e+00> : vector<20xf32>
    %30 = vector.multi_reduction <add>, %29, %cst_12 [1] : vector<20x20xf32> to vector<20xf32>
    %31 = vector.shape_cast %30 : vector<20xf32> to vector<20x1xf32>
    %32 = tpu.reciprocal %31 {approx = true} : vector<20x1xf32> -> vector<20x1xf32>
    %33 = vector.broadcast %32 : vector<20x1xf32> to vector<20x20xf32>
    %34 = arith.mulf %29, %33 : vector<20x20xf32>
    %cst_13 = arith.constant dense<0.000000e+00> : vector<20x16xf32>
    %35 = tpu.matmul %34, %20, %cst_13 {dimension_numbers = #tpu.dot_dimension_numbers<[1], [0], [0], [1], [0, 0, 1, 1], [], []>} : vector<20x20xf32>, vector<20x16xf32>, vector<20x16xf32> -> vector<20x16xf32>
    %36 = arith.truncf %35 : vector<20x16xf32> to vector<20x16xbf16>
    %c0_14 = arith.constant 0 : index
    %c0_15 = arith.constant 0 : index
    %c0_16 = arith.constant 0 : index
    %37 = vector.load %arg3[%c0_14, %c0_15, %c0_16] : memref<2x16x32xbf16, #tpu.memory_space<vmem>>, vector<1x16x32xbf16>
    %38 = vector.shape_cast %37 : vector<1x16x32xbf16> to vector<16x32xbf16>
    %cst_17 = arith.constant dense<0.000000e+00> : vector<20x32xf32>
    %39 = tpu.matmul %36, %38, %cst_17 {dimension_numbers = #tpu.dot_dimension_numbers<[1], [0], [0], [1], [0, 0, 1, 1], [], []>} : vector<20x16xbf16>, vector<16x32xbf16>, vector<20x32xf32> -> vector<20x32xf32>
    %40 = vector.broadcast %5 : vector<1x32xf32> to vector<20x32xf32>
    %41 = arith.addf %39, %40 : vector<20x32xf32>
    %42 = arith.addf %41, %0 : vector<20x32xf32>
    %cst_18 = arith.constant dense<0.000000e+00> : vector<20xf32>
    %43 = vector.multi_reduction <add>, %42, %cst_18 [1] : vector<20x32xf32> to vector<20xf32>
    %44 = vector.shape_cast %43 : vector<20xf32> to vector<20x1xf32>
    %cst_19 = arith.constant 3.200000e+01 : f32
    %45 = vector.broadcast %cst_19 : f32 to vector<20x1xf32>
    %46 = arith.divf %44, %45 : vector<20x1xf32>
    %47 = vector.broadcast %46 : vector<20x1xf32> to vector<20x32xf32>
    %48 = arith.subf %42, %47 : vector<20x32xf32>
    %49 = arith.mulf %48, %48 : vector<20x32xf32>
    %cst_20 = arith.constant dense<0.000000e+00> : vector<20xf32>
    %50 = vector.multi_reduction <add>, %49, %cst_20 [1] : vector<20x32xf32> to vector<20xf32>
    %51 = vector.shape_cast %50 : vector<20xf32> to vector<20x1xf32>
    %cst_21 = arith.constant 3.200000e+01 : f32
    %52 = vector.broadcast %cst_21 : f32 to vector<20x1xf32>
    %53 = arith.divf %51, %52 : vector<20x1xf32>
    %54 = vector.broadcast %46 : vector<20x1xf32> to vector<20x32xf32>
    %55 = arith.subf %42, %54 : vector<20x32xf32>
    %cst_22 = arith.constant 9.99999974E-6 : f32
    %56 = vector.broadcast %cst_22 : f32 to vector<20x1xf32>
    %57 = arith.addf %53, %56 : vector<20x1xf32>
    %58 = math.rsqrt %57 : vector<20x1xf32>
    %59 = vector.broadcast %58 : vector<20x1xf32> to vector<20x32xf32>
    %60 = arith.mulf %55, %59 : vector<20x32xf32>
    %61 = vector.broadcast %6 : vector<1x32xf32> to vector<20x32xf32>
    %62 = arith.mulf %60, %61 : vector<20x32xf32>
    %63 = vector.broadcast %7 : vector<1x32xf32> to vector<20x32xf32>
    %64 = arith.addf %62, %63 : vector<20x32xf32>
    %65 = arith.truncf %64 : vector<20x32xf32> to vector<20x32xbf16>
    %c0_23 = arith.constant 0 : index
    %c0_24 = arith.constant 0 : index
    %c0_25 = arith.constant 0 : index
    %66 = vector.load %arg4[%c0_23, %c0_24, %c0_25] : memref<2x32x64xbf16, #tpu.memory_space<vmem>>, vector<1x32x64xbf16>
    %67 = vector.shape_cast %66 : vector<1x32x64xbf16> to vector<32x64xbf16>
    %cst_26 = arith.constant dense<0.000000e+00> : vector<20x64xf32>
    %68 = tpu.matmul %65, %67, %cst_26 {dimension_numbers = #tpu.dot_dimension_numbers<[1], [0], [0], [1], [0, 0, 1, 1], [], []>} : vector<20x32xbf16>, vector<32x64xbf16>, vector<20x64xf32> -> vector<20x64xf32>
    %69 = vector.broadcast %8 : vector<1x64xf32> to vector<20x64xf32>
    %70 = arith.addf %68, %69 : vector<20x64xf32>
    %cst_27 = arith.constant 0.000000e+00 : f32
    %71 = vector.broadcast %cst_27 : f32 to vector<20x64xf32>
    %72 = arith.maximumf %70, %71 : vector<20x64xf32>
    %73 = arith.truncf %72 : vector<20x64xf32> to vector<20x64xbf16>
    %c0_28 = arith.constant 0 : index
    %c0_29 = arith.constant 0 : index
    %c0_30 = arith.constant 0 : index
    %74 = vector.load %arg5[%c0_28, %c0_29, %c0_30] : memref<2x64x32xbf16, #tpu.memory_space<vmem>>, vector<1x64x32xbf16>
    %75 = vector.shape_cast %74 : vector<1x64x32xbf16> to vector<64x32xbf16>
    %cst_31 = arith.constant dense<0.000000e+00> : vector<20x32xf32>
    %76 = tpu.matmul %73, %75, %cst_31 {dimension_numbers = #tpu.dot_dimension_numbers<[1], [0], [0], [1], [0, 0, 1, 1], [], []>} : vector<20x64xbf16>, vector<64x32xbf16>, vector<20x32xf32> -> vector<20x32xf32>
    %77 = vector.broadcast %9 : vector<1x32xf32> to vector<20x32xf32>
    %78 = arith.addf %76, %77 : vector<20x32xf32>
    %79 = arith.addf %78, %64 : vector<20x32xf32>
    %cst_32 = arith.constant dense<0.000000e+00> : vector<20xf32>
    %80 = vector.multi_reduction <add>, %79, %cst_32 [1] : vector<20x32xf32> to vector<20xf32>
    %81 = vector.shape_cast %80 : vector<20xf32> to vector<20x1xf32>
    %cst_33 = arith.constant 3.200000e+01 : f32
    %82 = vector.broadcast %cst_33 : f32 to vector<20x1xf32>
    %83 = arith.divf %81, %82 : vector<20x1xf32>
    %84 = vector.broadcast %83 : vector<20x1xf32> to vector<20x32xf32>
    %85 = arith.subf %79, %84 : vector<20x32xf32>
    %86 = arith.mulf %85, %85 : vector<20x32xf32>
    %cst_34 = arith.constant dense<0.000000e+00> : vector<20xf32>
    %87 = vector.multi_reduction <add>, %86, %cst_34 [1] : vector<20x32xf32> to vector<20xf32>
    %88 = vector.shape_cast %87 : vector<20xf32> to vector<20x1xf32>
    %cst_35 = arith.constant 3.200000e+01 : f32
    %89 = vector.broadcast %cst_35 : f32 to vector<20x1xf32>
    %90 = arith.divf %88, %89 : vector<20x1xf32>
    %91 = vector.broadcast %83 : vector<20x1xf32> to vector<20x32xf32>
    %92 = arith.subf %79, %91 : vector<20x32xf32>
    %cst_36 = arith.constant 9.99999974E-6 : f32
    %93 = vector.broadcast %cst_36 : f32 to vector<20x1xf32>
    %94 = arith.addf %90, %93 : vector<20x1xf32>
    %95 = math.rsqrt %94 : vector<20x1xf32>
    %96 = vector.broadcast %95 : vector<20x1xf32> to vector<20x32xf32>
    %97 = arith.mulf %92, %96 : vector<20x32xf32>
    %98 = vector.broadcast %10 : vector<1x32xf32> to vector<20x32xf32>
    %99 = arith.mulf %97, %98 : vector<20x32xf32>
    %100 = vector.broadcast %11 : vector<1x32xf32> to vector<20x32xf32>
    %101 = arith.addf %99, %100 : vector<20x32xf32>
    %c1 = arith.constant 1 : index
    %c0_37 = arith.constant 0 : index
    %c0_38 = arith.constant 0 : index
    %102 = vector.load %arg6[%c1, %c0_37, %c0_38] : memref<2x8x64xf32, #tpu.memory_space<vmem>>, vector<1x8x64xf32>
    %103 = vector.shape_cast %102 : vector<1x8x64xf32> to vector<8x64xf32>
    %104 = vector.extract_strided_slice %103 {offsets = [0, 0], sizes = [1, 48], strides = [1, 1]} : vector<8x64xf32> to vector<1x48xf32>
    %105 = vector.extract_strided_slice %103 {offsets = [1, 0], sizes = [1, 32], strides = [1, 1]} : vector<8x64xf32> to vector<1x32xf32>
    %106 = vector.extract_strided_slice %103 {offsets = [2, 0], sizes = [1, 32], strides = [1, 1]} : vector<8x64xf32> to vector<1x32xf32>
    %107 = vector.extract_strided_slice %103 {offsets = [3, 0], sizes = [1, 32], strides = [1, 1]} : vector<8x64xf32> to vector<1x32xf32>
    %108 = vector.extract_strided_slice %103 {offsets = [4, 0], sizes = [1, 64], strides = [1, 1]} : vector<8x64xf32> to vector<1x64xf32>
    %109 = vector.extract_strided_slice %103 {offsets = [5, 0], sizes = [1, 32], strides = [1, 1]} : vector<8x64xf32> to vector<1x32xf32>
    %110 = vector.extract_strided_slice %103 {offsets = [6, 0], sizes = [1, 32], strides = [1, 1]} : vector<8x64xf32> to vector<1x32xf32>
    %111 = vector.extract_strided_slice %103 {offsets = [7, 0], sizes = [1, 32], strides = [1, 1]} : vector<8x64xf32> to vector<1x32xf32>
    %112 = arith.truncf %101 : vector<20x32xf32> to vector<20x32xbf16>
    %c1_39 = arith.constant 1 : index
    %c0_40 = arith.constant 0 : index
    %c0_41 = arith.constant 0 : index
    %113 = vector.load %arg2[%c1_39, %c0_40, %c0_41] : memref<2x32x48xbf16, #tpu.memory_space<vmem>>, vector<1x32x48xbf16>
    %114 = vector.shape_cast %113 : vector<1x32x48xbf16> to vector<32x48xbf16>
    %cst_42 = arith.constant dense<0.000000e+00> : vector<20x48xf32>
    %115 = tpu.matmul %112, %114, %cst_42 {dimension_numbers = #tpu.dot_dimension_numbers<[1], [0], [0], [1], [0, 0, 1, 1], [], []>} : vector<20x32xbf16>, vector<32x48xbf16>, vector<20x48xf32> -> vector<20x48xf32>
    %116 = vector.broadcast %104 : vector<1x48xf32> to vector<20x48xf32>
    %117 = arith.addf %115, %116 : vector<20x48xf32>
    %118 = vector.extract_strided_slice %117 {offsets = [0, 0], sizes = [20, 16], strides = [1, 1]} : vector<20x48xf32> to vector<20x16xf32>
    %119 = vector.extract_strided_slice %117 {offsets = [0, 16], sizes = [20, 16], strides = [1, 1]} : vector<20x48xf32> to vector<20x16xf32>
    %120 = vector.extract_strided_slice %117 {offsets = [0, 32], sizes = [20, 16], strides = [1, 1]} : vector<20x48xf32> to vector<20x16xf32>
    %cst_43 = arith.constant dense<0.000000e+00> : vector<20x20xf32>
    %121 = tpu.matmul %118, %119, %cst_43 {dimension_numbers = #tpu.dot_dimension_numbers<[1], [1], [0], [0], [0, 0, 1, 0], [], []>} : vector<20x16xf32>, vector<20x16xf32>, vector<20x20xf32> -> vector<20x20xf32>
    %cst_44 = arith.constant 2.500000e-01 : f32
    %122 = vector.broadcast %cst_44 : f32 to vector<20x20xf32>
    %123 = arith.mulf %121, %122 : vector<20x20xf32>
    %124 = arith.addf %123, %1 : vector<20x20xf32>
    %cst_45 = arith.constant dense<0xFF800000> : vector<20xf32>
    %125 = vector.multi_reduction <maximumf>, %124, %cst_45 [1] : vector<20x20xf32> to vector<20xf32>
    %126 = vector.shape_cast %125 : vector<20xf32> to vector<20x1xf32>
    %127 = vector.broadcast %126 : vector<20x1xf32> to vector<20x20xf32>
    %128 = arith.subf %124, %127 : vector<20x20xf32>
    %129 = math.exp %128 : vector<20x20xf32>
    %cst_46 = arith.constant dense<0.000000e+00> : vector<20xf32>
    %130 = vector.multi_reduction <add>, %129, %cst_46 [1] : vector<20x20xf32> to vector<20xf32>
    %131 = vector.shape_cast %130 : vector<20xf32> to vector<20x1xf32>
    %132 = tpu.reciprocal %131 {approx = true} : vector<20x1xf32> -> vector<20x1xf32>
    %133 = vector.broadcast %132 : vector<20x1xf32> to vector<20x20xf32>
    %134 = arith.mulf %129, %133 : vector<20x20xf32>
    %cst_47 = arith.constant dense<0.000000e+00> : vector<20x16xf32>
    %135 = tpu.matmul %134, %120, %cst_47 {dimension_numbers = #tpu.dot_dimension_numbers<[1], [0], [0], [1], [0, 0, 1, 1], [], []>} : vector<20x20xf32>, vector<20x16xf32>, vector<20x16xf32> -> vector<20x16xf32>
    %136 = arith.truncf %135 : vector<20x16xf32> to vector<20x16xbf16>
    %c1_48 = arith.constant 1 : index
    %c0_49 = arith.constant 0 : index
    %c0_50 = arith.constant 0 : index
    %137 = vector.load %arg3[%c1_48, %c0_49, %c0_50] : memref<2x16x32xbf16, #tpu.memory_space<vmem>>, vector<1x16x32xbf16>
    %138 = vector.shape_cast %137 : vector<1x16x32xbf16> to vector<16x32xbf16>
    %cst_51 = arith.constant dense<0.000000e+00> : vector<20x32xf32>
    %139 = tpu.matmul %136, %138, %cst_51 {dimension_numbers = #tpu.dot_dimension_numbers<[1], [0], [0], [1], [0, 0, 1, 1], [], []>} : vector<20x16xbf16>, vector<16x32xbf16>, vector<20x32xf32> -> vector<20x32xf32>
    %140 = vector.broadcast %105 : vector<1x32xf32> to vector<20x32xf32>
    %141 = arith.addf %139, %140 : vector<20x32xf32>
    %142 = arith.addf %141, %101 : vector<20x32xf32>
    %cst_52 = arith.constant dense<0.000000e+00> : vector<20xf32>
    %143 = vector.multi_reduction <add>, %142, %cst_52 [1] : vector<20x32xf32> to vector<20xf32>
    %144 = vector.shape_cast %143 : vector<20xf32> to vector<20x1xf32>
    %cst_53 = arith.constant 3.200000e+01 : f32
    %145 = vector.broadcast %cst_53 : f32 to vector<20x1xf32>
    %146 = arith.divf %144, %145 : vector<20x1xf32>
    %147 = vector.broadcast %146 : vector<20x1xf32> to vector<20x32xf32>
    %148 = arith.subf %142, %147 : vector<20x32xf32>
    %149 = arith.mulf %148, %148 : vector<20x32xf32>
    %cst_54 = arith.constant dense<0.000000e+00> : vector<20xf32>
    %150 = vector.multi_reduction <add>, %149, %cst_54 [1] : vector<20x32xf32> to vector<20xf32>
    %151 = vector.shape_cast %150 : vector<20xf32> to vector<20x1xf32>
    %cst_55 = arith.constant 3.200000e+01 : f32
    %152 = vector.broadcast %cst_55 : f32 to vector<20x1xf32>
    %153 = arith.divf %151, %152 : vector<20x1xf32>
    %154 = vector.broadcast %146 : vector<20x1xf32> to vector<20x32xf32>
    %155 = arith.subf %142, %154 : vector<20x32xf32>
    %cst_56 = arith.constant 9.99999974E-6 : f32
    %156 = vector.broadcast %cst_56 : f32 to vector<20x1xf32>
    %157 = arith.addf %153, %156 : vector<20x1xf32>
    %158 = math.rsqrt %157 : vector<20x1xf32>
    %159 = vector.broadcast %158 : vector<20x1xf32> to vector<20x32xf32>
    %160 = arith.mulf %155, %159 : vector<20x32xf32>
    %161 = vector.broadcast %106 : vector<1x32xf32> to vector<20x32xf32>
    %162 = arith.mulf %160, %161 : vector<20x32xf32>
    %163 = vector.broadcast %107 : vector<1x32xf32> to vector<20x32xf32>
    %164 = arith.addf %162, %163 : vector<20x32xf32>
    %165 = arith.truncf %164 : vector<20x32xf32> to vector<20x32xbf16>
    %c1_57 = arith.constant 1 : index
    %c0_58 = arith.constant 0 : index
    %c0_59 = arith.constant 0 : index
    %166 = vector.load %arg4[%c1_57, %c0_58, %c0_59] : memref<2x32x64xbf16, #tpu.memory_space<vmem>>, vector<1x32x64xbf16>
    %167 = vector.shape_cast %166 : vector<1x32x64xbf16> to vector<32x64xbf16>
    %cst_60 = arith.constant dense<0.000000e+00> : vector<20x64xf32>
    %168 = tpu.matmul %165, %167, %cst_60 {dimension_numbers = #tpu.dot_dimension_numbers<[1], [0], [0], [1], [0, 0, 1, 1], [], []>} : vector<20x32xbf16>, vector<32x64xbf16>, vector<20x64xf32> -> vector<20x64xf32>
    %169 = vector.broadcast %108 : vector<1x64xf32> to vector<20x64xf32>
    %170 = arith.addf %168, %169 : vector<20x64xf32>
    %cst_61 = arith.constant 0.000000e+00 : f32
    %171 = vector.broadcast %cst_61 : f32 to vector<20x64xf32>
    %172 = arith.maximumf %170, %171 : vector<20x64xf32>
    %173 = arith.truncf %172 : vector<20x64xf32> to vector<20x64xbf16>
    %c1_62 = arith.constant 1 : index
    %c0_63 = arith.constant 0 : index
    %c0_64 = arith.constant 0 : index
    %174 = vector.load %arg5[%c1_62, %c0_63, %c0_64] : memref<2x64x32xbf16, #tpu.memory_space<vmem>>, vector<1x64x32xbf16>
    %175 = vector.shape_cast %174 : vector<1x64x32xbf16> to vector<64x32xbf16>
    %cst_65 = arith.constant dense<0.000000e+00> : vector<20x32xf32>
    %176 = tpu.matmul %173, %175, %cst_65 {dimension_numbers = #tpu.dot_dimension_numbers<[1], [0], [0], [1], [0, 0, 1, 1], [], []>} : vector<20x64xbf16>, vector<64x32xbf16>, vector<20x32xf32> -> vector<20x32xf32>
    %177 = vector.broadcast %109 : vector<1x32xf32> to vector<20x32xf32>
    %178 = arith.addf %176, %177 : vector<20x32xf32>
    %179 = arith.addf %178, %164 : vector<20x32xf32>
    %cst_66 = arith.constant dense<0.000000e+00> : vector<20xf32>
    %180 = vector.multi_reduction <add>, %179, %cst_66 [1] : vector<20x32xf32> to vector<20xf32>
    %181 = vector.shape_cast %180 : vector<20xf32> to vector<20x1xf32>
    %cst_67 = arith.constant 3.200000e+01 : f32
    %182 = vector.broadcast %cst_67 : f32 to vector<20x1xf32>
    %183 = arith.divf %181, %182 : vector<20x1xf32>
    %184 = vector.broadcast %183 : vector<20x1xf32> to vector<20x32xf32>
    %185 = arith.subf %179, %184 : vector<20x32xf32>
    %186 = arith.mulf %185, %185 : vector<20x32xf32>
    %cst_68 = arith.constant dense<0.000000e+00> : vector<20xf32>
    %187 = vector.multi_reduction <add>, %186, %cst_68 [1] : vector<20x32xf32> to vector<20xf32>
    %188 = vector.shape_cast %187 : vector<20xf32> to vector<20x1xf32>
    %cst_69 = arith.constant 3.200000e+01 : f32
    %189 = vector.broadcast %cst_69 : f32 to vector<20x1xf32>
    %190 = arith.divf %188, %189 : vector<20x1xf32>
    %191 = vector.broadcast %183 : vector<20x1xf32> to vector<20x32xf32>
    %192 = arith.subf %179, %191 : vector<20x32xf32>
    %cst_70 = arith.constant 9.99999974E-6 : f32
    %193 = vector.broadcast %cst_70 : f32 to vector<20x1xf32>
    %194 = arith.addf %190, %193 : vector<20x1xf32>
    %195 = math.rsqrt %194 : vector<20x1xf32>
    %196 = vector.broadcast %195 : vector<20x1xf32> to vector<20x32xf32>
    %197 = arith.mulf %192, %196 : vector<20x32xf32>
    %198 = vector.broadcast %110 : vector<1x32xf32> to vector<20x32xf32>
    %199 = arith.mulf %197, %198 : vector<20x32xf32>
    %200 = vector.broadcast %111 : vector<1x32xf32> to vector<20x32xf32>
    %201 = arith.addf %199, %200 : vector<20x32xf32>
    %202 = arith.truncf %201 : vector<20x32xf32> to vector<20x32xbf16>
    %c0_71 = arith.constant 0 : index
    %c0_72 = arith.constant 0 : index
    %203 = vector.load %arg7[%c0_71, %c0_72] : memref<32x64xbf16, #tpu.memory_space<vmem>>, vector<32x64xbf16>
    %c0_73 = arith.constant 0 : index
    %c0_74 = arith.constant 0 : index
    %204 = vector.load %arg8[%c0_73, %c0_74] : memref<1x64xf32, #tpu.memory_space<vmem>>, vector<1x64xf32>
    %cst_75 = arith.constant dense<0.000000e+00> : vector<20x64xf32>
    %205 = tpu.matmul %202, %203, %cst_75 {dimension_numbers = #tpu.dot_dimension_numbers<[1], [0], [0], [1], [0, 0, 1, 1], [], []>} : vector<20x32xbf16>, vector<32x64xbf16>, vector<20x64xf32> -> vector<20x64xf32>
    %206 = vector.broadcast %204 : vector<1x64xf32> to vector<20x64xf32>
    %207 = arith.addf %205, %206 : vector<20x64xf32>
    %c0_76 = arith.constant 0 : index
    %c0_77 = arith.constant 0 : index
    %208 = vector.load %arg9[%c0_76, %c0_77] : memref<20x64xf32, #tpu.memory_space<vmem>>, vector<20x64xf32>
    tpu.vector_store %arg9[%c0_76, %c0_77], %207 {strides = array<i32>} : memref<20x64xf32, #tpu.memory_space<vmem>>, vector<20x64xf32>,
    return
  }
}

</mosaic_0001>

<llo_original>
// kernel: encode.1
$region0: #{encode.1}
  #allocation0 [shape = 'u32[]', space=smem, size = 0x4, offset = 0x4, fixed_abs, tag = 'smem constant byte address 0x4 - core index']
  #allocation1 [shape = 'u32[144,128]{1,0:T(1,128)}', space=vmem, size = 0x12000, scoped, tag = 'internal scratch']
  %s0 = inlined_call_operand.vmem [shape: f32[20,32], index: 0, kind: input, shape index: {}]
  %s1 = inlined_call_operand.vmem [shape: f32[20,20], index: 1, kind: input, shape index: {}]
  %s2 = inlined_call_operand.vmem [shape: bf16[2,32,48], index: 2, kind: input, shape index: {}]
  %s3 = inlined_call_operand.vmem [shape: bf16[2,16,32], index: 3, kind: input, shape index: {}]
  %s4 = inlined_call_operand.vmem [shape: bf16[2,32,64], index: 4, kind: input, shape index: {}]
  %s5 = inlined_call_operand.vmem [shape: bf16[2,64,32], index: 5, kind: input, shape index: {}]
  %s6 = inlined_call_operand.vmem [shape: f32[2,8,64], index: 6, kind: input, shape index: {}]
  %s7 = inlined_call_operand.vmem [shape: bf16[32,64], index: 7, kind: input, shape index: {}]
  %s8 = inlined_call_operand.vmem [shape: f32[1,64], index: 8, kind: input, shape index: {}]
  %s9 = inlined_call_operand.hbm [shape: f32[20,64], index: 9, kind: output, shape index: {}]
  %s10 = sld [smem:[#allocation0]]
  $region46: #{encode.1} parent=0
    _
  %s12 = ssub.s32 1, %s10
  %s13 = scalar_select 0, %s12, %s10
  $region1: #{encode.1} parent=0
    #allocation2 [shape = 'u8[12288]{0}', space=vmem, size = 0x3000, scoped, tag = 'output window, operand 0, single buffered']
    #allocation3 [shape = 's32[1]{0}', space=sflag, size = 0x4, scoped, tag = 'scoped memory for encode.1']
    %14 = vsyncpa [#allocation3], 0
    // Predicated region
    $region2: #{encode.1} parent=1 // pred_check
      _
    $region3: #{encode.1} parent=1 // pred_check_branch
      %16 = sbr.rel (0) target = $region5
    $region4: #{encode.1} parent=1 // pred_region
      _
    $region5: #{encode.1} parent=1 // pred_fallthru
      _
    // Predicated region
    $region6: #{encode.1} parent=1 // pred_check
      _
    $region7: #{encode.1} parent=1 // pred_check_branch
      %18 = sbr.rel (0) target = $region9
    $region8: #{encode.1} parent=1 // pred_region
      _
    $region9: #{encode.1} parent=1 // pred_fallthru
      _
    // Predicated region
    $region10: #{encode.1} parent=1 // pred_check
      _
    $region11: #{encode.1} parent=1 // pred_check_branch
      %20 = sbr.rel (0) target = $region13
    $region12: #{encode.1} parent=1 // pred_region
      _
    $region13: #{encode.1} parent=1 // pred_fallthru
      _
    // Predicated region
    $region14: #{encode.1} parent=1 // pred_check
      _
    $region15: #{encode.1} parent=1 // pred_check_branch
      %22 = sbr.rel (0) target = $region17
    $region16: #{encode.1} parent=1 // pred_region
      _
    $region17: #{encode.1} parent=1 // pred_fallthru
      _
    // Predicated region
    $region18: #{encode.1} parent=1 // pred_check
      _
    $region19: #{encode.1} parent=1 // pred_check_branch
      %24 = sbr.rel (0) target = $region21
    $region20: #{encode.1} parent=1 // pred_region
      _
    $region21: #{encode.1} parent=1 // pred_fallthru
      _
    // Predicated region
    $region22: #{encode.1} parent=1 // pred_check
      _
    $region23: #{encode.1} parent=1 // pred_check_branch
      %26 = sbr.rel (0) target = $region25
    $region24: #{encode.1} parent=1 // pred_region
      _
    $region25: #{encode.1} parent=1 // pred_fallthru
      _
    // Predicated region
    $region26: #{encode.1} parent=1 // pred_check
      _
    $region27: #{encode.1} parent=1 // pred_check_branch
      %28 = sbr.rel (0) target = $region29
    $region28: #{encode.1} parent=1 // pred_region
      _
    $region29: #{encode.1} parent=1 // pred_fallthru
      _
    // Predicated region
    $region30: #{encode.1} parent=1 // pred_check
      _
    $region31: #{encode.1} parent=1 // pred_check_branch
      %30 = sbr.rel (0) target = $region33
    $region32: #{encode.1} parent=1 // pred_region
      _
    $region33: #{encode.1} parent=1 // pred_fallthru
      _
    // Predicated region
    $region34: #{encode.1} parent=1 // pred_check
      _
    $region35: #{encode.1} parent=1 // pred_check_branch
      %32 = sbr.rel (0) target = $region37
    $region36: #{encode.1} parent=1 // pred_region
      _
    $region37: #{encode.1} parent=1 // pred_fallthru
      _
    %v34 = vld [vmem:[%s0] sm:$0xff]
    %v35 = vld [vmem:[%s0 + $0x8] sm:$0xff]
    %v36 = vld [vmem:[%s0 + $0x10] sm:$0xf]
    %v37 = vld [vmem:[%s1] sm:$0xff]
    %v38 = vld [vmem:[%s1 + $0x8] sm:$0xff]
    %v39 = vld [vmem:[%s1 + $0x10] sm:$0xf]
    %v40 = vld [vmem:[%s6] sm:$0xff]
    %v41 = vpack.c.bf16 %v35, %v34
    %v42 = vpack.c.bf16 %v36, %v36
    %v43 = vld [vmem:[%s2] sm:$0xf]
    %v44 = vld [vmem:[%s2 + $0x4] sm:$0xf]
    %v45 = vld [vmem:[%s2 + $0x8] sm:$0xf]
    %v46 = vld [vmem:[%s2 + $0xc] sm:$0xf]
    %v47 = vlaneseq
    %v48 = vshrl.u32 %v47, 7
    %v49 = vsub.s32 0, %v48
    %v50 = vrot.slane %v40, %v49
    %v55 = vunpack.c.l.b16 %v43
    %v56 = vunpack.c.l.b16 %v44
    %v57 = vunpack.c.l.b16 %v45
    %v58 = vunpack.c.l.b16 %v46
    %v59 = vpack.c.b16 %v56, %v55
    %v60 = vpack.c.b16 %v58, %v57
    %vm63 = vcmask 261120
    %v65 = vsel %vm63, %v41, 0
    %v68 = vsel %vm63, %v42, 0
    %70 = vmatprep.subr.bf16.mxu0 0
    %71 = vmatpush1.bf16.msra.mxu0 0
    %72 = vmatprep.subr.bf16.mxu0 0
    %73 = vmatpush1.bf16.msra.mxu0 0
    %74 = vmatprep.subr.bf16.mxu0 0
    %75 = vmatpush1.bf16.msra.mxu0 0
    %76 = vmatprep.subr.bf16.mxu0 0
    %77 = vmatpush1.bf16.msra.mxu0 0
    %78 = vmatprep.subr.bf16.mxu0 0
    %79 = vmatpush1.bf16.msra.mxu0 0
    %80 = vmatprep.subr.bf16.mxu0 0
    %81 = vmatpush1.bf16.msra.mxu0 0
    %82 = vmatprep.subr.bf16.mxu0 0
    %83 = vmatpush1.bf16.msra.mxu0 %v60
    %84 = vmatprep.subr.bf16.mxu0 0
    %85 = vmatpush1.bf16.msra.mxu0 %v59
    %86 = vmatprep.subr.bf16.mxu0 0
    %87 = vmatpush2.bf16.msra.mxu0 0
    %88 = vmatprep.subr.bf16.mxu0 0
    %89 = vmatpush2.bf16.msra.mxu0 0
    %90 = vmatprep.subr.bf16.mxu0 0
    %91 = vmatpush2.bf16.msra.mxu0 0
    %92 = vmatprep.subr.bf16.mxu0 0
    %93 = vmatpush2.bf16.msra.mxu0 0
    %94 = vmatprep.subr.bf16.mxu0 0
    %95 = vmatpush2.bf16.msra.mxu0 0
    %96 = vmatprep.subr.bf16.mxu0 0
    %97 = vmatpush2.bf16.msra.mxu0 0
    %98 = vmatprep.subr.bf16.mxu0 0
    %99 = vmatpush2.bf16.msra.mxu0 0
    %100 = vmatprep.subr.bf16.mxu0 0
    %101 = vmatpush2.bf16.msra.mxu0 0
    %102 = vmatprep.mubr.bf16.mxu0 0
    %103 = vmatmul.mubr.bf16.gmra.mxu0 %v65
    %v104 = vpop.f32.mrf.mxu0
    %v105 = vadd.f32 %v50, %v104
    %v106 = vpop.f32.mrf.mxu0
    %v107 = vpop.f32.mrf.mxu0
    %v108 = vadd.f32 %v50, %v107
    %v109 = vpop.f32.mrf.mxu0
    %110 = vmatprep.mubr.bf16.mxu0 0
    %111 = vmatmul.mubr.bf16.gmra.mxu0 %v68
    %v112 = vpop.f32.mrf.mxu0
    %v113 = vadd.f32 %v50, %v112
    %v114 = vpop.f32.mrf.mxu0
    %v115 = vpop.f32.mrf.mxu0
    %v116 = vpop.f32.mrf.mxu0
    %117 = vdwg.mxu0
    %121 = vrot.lane.b32.xlu0 %v105, 112
    %v122 = vpop.permute.xlu0 %121
    %123 = vrot.lane.b32.xlu0 %v108, 112
    %v124 = vpop.permute.xlu0 %123
    %125 = vrot.lane.b32.xlu0 %v113, 112
    %v126 = vpop.permute.xlu0 %125
    %vm127 = vcmask 130048
    %v128 = vsel %vm127, %v105, 0
    %v130 = vsel %vm127, %v108, 0
    %v132 = vsel %vm127, %v113, 0
    %v134 = vsel %vm127, %v122, 0
    %v136 = vsel %vm127, %v124, 0
    %v138 = vsel %vm127, %v126, 0
    %140 = vmatprep.subr.mxu0 0.0
    %141 = vmatpush1.xpose.msra.mxu0 0.0
    %142 = vmatprep.subr.mxu0 0.0
    %143 = vmatpush1.xpose.msra.mxu0 0.0
    %144 = vmatprep.subr.mxu0 0.0
    %145 = vmatpush1.xpose.msra.mxu0 0.0
    %146 = vmatprep.subr.mxu0 0.0
    %147 = vmatpush1.xpose.msra.mxu0 0.0
    %148 = vmatprep.subr.mxu0 0.0
    %149 = vmatpush1.xpose.msra.mxu0 0.0
    %150 = vmatprep.subr.mxu0 0.0
    %151 = vmatpush1.xpose.msra.mxu0 0.0
    %152 = vmatprep.subr.mxu0 0.0
    %153 = vmatpush1.xpose.msra.mxu0 0.0
    %154 = vmatprep.subr.mxu0 0.0
    %155 = vmatpush1.xpose.msra.mxu0 0.0
    %156 = vmatprep.subr.mxu0 0.0
    %157 = vmatpush1.xpose.msra.mxu0 0.0
    %158 = vmatprep.subr.mxu0 0.0
    %159 = vmatpush1.xpose.msra.mxu0 0.0
    %160 = vmatprep.subr.mxu0 0.0
    %161 = vmatpush1.xpose.msra.mxu0 0.0
    %162 = vmatprep.subr.mxu0 0.0
    %163 = vmatpush1.xpose.msra.mxu0 0.0
    %164 = vmatprep.subr.mxu0 0.0
    %165 = vmatpush1.xpose.msra.mxu0 0.0
    %166 = vmatprep.subr.mxu0 0.0
    %167 = vmatpush1.xpose.msra.mxu0 %v138
    %168 = vmatprep.subr.mxu0 0.0
    %169 = vmatpush1.xpose.msra.mxu0 %v136
    %170 = vmatprep.subr.mxu0 0.0
    %171 = vmatpush1.xpose.msra.mxu0 %v134
    %172 = vmatprep.subr.mxu0 0.0
    %173 = vmatpush2.xpose.msra.mxu0 0.0
    %174 = vmatprep.subr.mxu0 0.0
    %175 = vmatpush2.xpose.msra.mxu0 0.0
    %176 = vmatprep.subr.mxu0 0.0
    %177 = vmatpush2.xpose.msra.mxu0 0.0
    %178 = vmatprep.subr.mxu0 0.0
    %179 = vmatpush2.xpose.msra.mxu0 0.0
    %180 = vmatprep.subr.mxu0 0.0
    %181 = vmatpush2.xpose.msra.mxu0 0.0
    %182 = vmatprep.subr.mxu0 0.0
    %183 = vmatpush2.xpose.msra.mxu0 0.0
    %184 = vmatprep.subr.mxu0 0.0
    %185 = vmatpush2.xpose.msra.mxu0 0.0
    %186 = vmatprep.subr.mxu0 0.0
    %187 = vmatpush2.xpose.msra.mxu0 0.0
    %188 = vmatprep.subr.mxu0 0.0
    %189 = vmatpush2.xpose.msra.mxu0 0.0
    %190 = vmatprep.subr.mxu0 0.0
    %191 = vmatpush2.xpose.msra.mxu0 0.0
    %192 = vmatprep.subr.mxu0 0.0
    %193 = vmatpush2.xpose.msra.mxu0 0.0
    %194 = vmatprep.subr.mxu0 0.0
    %195 = vmatpush2.xpose.msra.mxu0 0.0
    %196 = vmatprep.subr.mxu0 0.0
    %197 = vmatpush2.xpose.msra.mxu0 0.0
    %198 = vmatprep.subr.mxu0 0.0
    %199 = vmatpush2.xpose.msra.mxu0 0.0
    %200 = vmatprep.subr.mxu0 0.0
    %201 = vmatpush2.xpose.msra.mxu0 0.0
    %202 = vmatprep.subr.mxu0 0.0
    %203 = vmatpush2.xpose.msra.mxu0 0.0
    %204 = vmatprep.mubr.f32.mxu0 0.0
    %205 = vmatmul.mubr.f32.gmra.mxu0 %v128
    %v206 = vpop.f32.mrf.mxu0
    %v207 = vadd.f32 0.0, %v206
    %v208 = vpop.f32.mrf.mxu0
    %209 = vmatprep.mubr.f32.mxu0 0.0
    %210 = vmatmul.mubr.f32.gmra.mxu0 %v130
    %v211 = vpop.f32.mrf.mxu0
    %v212 = vadd.f32 0.0, %v211
    %v213 = vpop.f32.mrf.mxu0
    %214 = vmatprep.mubr.f32.mxu0 0.0
    %215 = vmatmul.mubr.f32.gmra.mxu0 %v132
    %v216 = vpop.f32.mrf.mxu0
    %v217 = vadd.f32 0.0, %v216
    %v218 = vpop.f32.mrf.mxu0
    %219 = vdwg.mxu0
    %v220 = vmul.f32 %v207, 0.25
    %v221 = vmul.f32 %v212, 0.25
    %v222 = vmul.f32 %v217, 0.25
    %v223 = vadd.f32 %v220, %v37
    %v224 = vadd.f32 %v221, %v38
    %v225 = vadd.f32 %v222, %v39
    %vm226 = vcmask 162816
    %v227 = vsel %vm226, %v223, -inf
    %228 = vmax.xlane.f32.xlu0 %v227
    %v229 = vpop.xlane.xlu0 %228
    %v230 = vsel %vm226, %v224, -inf
    %231 = vmax.xlane.f32.xlu0 %v230
    %v232 = vpop.xlane.xlu0 %231
    %vm233 = vcmask 158720
    %v234 = vsel %vm233, %v225, -inf
    %235 = vmax.xlane.f32.xlu0 %v234
    %v236 = vpop.xlane.xlu0 %235
    %v237 = vsub.f32 %v223, %v229
    %v238 = vsub.f32 %v224, %v232
    %v239 = vsub.f32 %v225, %v236
    %v240 = vmul.f32 %v237, 1.442695
    %v241 = vpow.pop %v240
    %v242 = vmul.f32 %v238, 1.442695
    %v243 = vpow.pop %v242
    %v244 = vmul.f32 %v239, 1.442695
    %v245 = vpow.pop %v244
    %v246 = vsel %vm226, %v241, 0.0
    %247 = vadd.xlane.f32.xlu0 %v246
    %v248 = vpop.xlane.xlu0 %247
    %v249 = vsel %vm226, %v243, 0.0
    %250 = vadd.xlane.f32.xlu0 %v249
    %v251 = vpop.xlane.xlu0 %250
    %v252 = vsel %vm233, %v245, 0.0
    %253 = vadd.xlane.f32.xlu0 %v252
    %v254 = vpop.xlane.xlu0 %253
    %v255 = vrcp.pop %v248
    %v256 = vrcp.pop %v251
    %v257 = vrcp.pop %v254
    %v258 = vmul.f32 %v241, %v255
    %v259 = vmul.f32 %v243, %v256
    %v260 = vmul.f32 %v245, %v257
    %261 = vrot.lane.b32.xlu0 %v105, 96
    %v262 = vpop.permute.xlu0 %261
    %263 = vrot.lane.b32.xlu0 %v108, 96
    %v264 = vpop.permute.xlu0 %263
    %265 = vrot.lane.b32.xlu0 %v113, 96
    %v266 = vpop.permute.xlu0 %265
    %v270 = vsel %vm226, %v258, 0
    %v273 = vsel %vm226, %v259, 0
    %v276 = vsel %vm226, %v260, 0
    %vm278 = vcmask 1043456
    %v279 = vsel %vm278, %v266, 0
    %281 = vmatprep.subr.mxu0 0.0
    %282 = vmatpush1.msra.mxu0 0.0
    %283 = vmatprep.subr.mxu0 0.0
    %284 = vmatpush1.msra.mxu0 0.0
    %285 = vmatprep.subr.mxu0 0.0
    %286 = vmatpush1.msra.mxu0 0.0
    %287 = vmatprep.subr.mxu0 0.0
    %288 = vmatpush1.msra.mxu0 0.0
    %289 = vmatprep.subr.mxu0 0.0
    %290 = vmatpush1.msra.mxu0 0.0
    %291 = vmatprep.subr.mxu0 0.0
    %292 = vmatpush1.msra.mxu0 0.0
    %293 = vmatprep.subr.mxu0 0.0
    %294 = vmatpush1.msra.mxu0 0.0
    %295 = vmatprep.subr.mxu0 0.0
    %296 = vmatpush1.msra.mxu0 0.0
    %297 = vmatprep.subr.mxu0 0.0
    %298 = vmatpush1.msra.mxu0 0.0
    %299 = vmatprep.subr.mxu0 0.0
    %300 = vmatpush1.msra.mxu0 0.0
    %301 = vmatprep.subr.mxu0 0.0
    %302 = vmatpush1.msra.mxu0 0.0
    %303 = vmatprep.subr.mxu0 0.0
    %304 = vmatpush1.msra.mxu0 0.0
    %305 = vmatprep.subr.mxu0 0.0
    %306 = vmatpush1.msra.mxu0 0.0
    %307 = vmatprep.subr.mxu0 0.0
    %308 = vmatpush1.msra.mxu0 %v279
    %309 = vmatprep.subr.mxu0 0.0
    %310 = vmatpush1.msra.mxu0 %v264
    %311 = vmatprep.subr.mxu0 0.0
    %312 = vmatpush1.msra.mxu0 %v262
    %313 = vmatprep.subr.mxu0 0.0
    %314 = vmatpush2.msra.mxu0 0.0
    %315 = vmatprep.subr.mxu0 0.0
    %316 = vmatpush2.msra.mxu0 0.0
    %317 = vmatprep.subr.mxu0 0.0
    %318 = vmatpush2.msra.mxu0 0.0
    %319 = vmatprep.subr.mxu0 0.0
    %320 = vmatpush2.msra.mxu0 0.0
    %321 = vmatprep.subr.mxu0 0.0
    %322 = vmatpush2.msra.mxu0 0.0
    %323 = vmatprep.subr.mxu0 0.0
    %324 = vmatpush2.msra.mxu0 0.0
    %325 = vmatprep.subr.mxu0 0.0
    %326 = vmatpush2.msra.mxu0 0.0
    %327 = vmatprep.subr.mxu0 0.0
    %328 = vmatpush2.msra.mxu0 0.0
    %329 = vmatprep.subr.mxu0 0.0
    %330 = vmatpush2.msra.mxu0 0.0
    %331 = vmatprep.subr.mxu0 0.0
    %332 = vmatpush2.msra.mxu0 0.0
    %333 = vmatprep.subr.mxu0 0.0
    %334 = vmatpush2.msra.mxu0 0.0
    %335 = vmatprep.subr.mxu0 0.0
    %336 = vmatpush2.msra.mxu0 0.0
    %337 = vmatprep.subr.mxu0 0.0
    %338 = vmatpush2.msra.mxu0 0.0
    %339 = vmatprep.subr.mxu0 0.0
    %340 = vmatpush2.msra.mxu0 0.0
    %341 = vmatprep.subr.mxu0 0.0
    %342 = vmatpush2.msra.mxu0 0.0
    %343 = vmatprep.subr.mxu0 0.0
    %344 = vmatpush2.msra.mxu0 0.0
    %345 = vmatprep.mubr.f32.mxu0 0.0
    %346 = vmatmul.mubr.f32.gmra.mxu0 %v270
    %v347 = vpop.f32.mrf.mxu0
    %v348 = vadd.f32 0.0, %v347
    %v349 = vpop.f32.mrf.mxu0
    %350 = vmatprep.mubr.f32.mxu0 0.0
    %351 = vmatmul.mubr.f32.gmra.mxu0 %v273
    %v352 = vpop.f32.mrf.mxu0
    %v353 = vadd.f32 0.0, %v352
    %v354 = vpop.f32.mrf.mxu0
    %355 = vmatprep.mubr.f32.mxu0 0.0
    %356 = vmatmul.mubr.f32.gmra.mxu0 %v276
    %v357 = vpop.f32.mrf.mxu0
    %v358 = vadd.f32 0.0, %v357
    %v359 = vpop.f32.mrf.mxu0
    %360 = vdwg.mxu0
    %v361 = vpack.c.bf16 %v353, %v348
    %v362 = vpack.c.bf16 %v358, %v358
    %v363 = vld [vmem:[%s3] sm:$0xf]
    %v364 = vld [vmem:[%s3 + $0x4] sm:$0xf]
    %v365 = vlaneseq
    %v366 = vshrl.u32 %v365, 7
    %v367 = vsub.s32 1, %v366
    %v368 = vrot.slane %v40, %v367
    %v371 = vunpack.c.l.b16 %v363
    %v372 = vunpack.c.l.b16 %v364
    %v373 = vpack.c.b16 %v372, %v371
    %v376 = vsel %vm127, %v361, 0
    %v379 = vsel %vm127, %v362, 0
    %381 = vmatprep.subr.bf16.mxu0 0
    %382 = vmatpush1.bf16.msra.mxu0 0
    %383 = vmatprep.subr.bf16.mxu0 0
    %384 = vmatpush1.bf16.msra.mxu0 0
    %385 = vmatprep.subr.bf16.mxu0 0
    %386 = vmatpush1.bf16.msra.mxu0 0
    %387 = vmatprep.subr.bf16.mxu0 0
    %388 = vmatpush1.bf16.msra.mxu0 0
    %389 = vmatprep.subr.bf16.mxu0 0
    %390 = vmatpush1.bf16.msra.mxu0 0
    %391 = vmatprep.subr.bf16.mxu0 0
    %392 = vmatpush1.bf16.msra.mxu0 0
    %393 = vmatprep.subr.bf16.mxu0 0
    %394 = vmatpush1.bf16.msra.mxu0 0
    %395 = vmatprep.subr.bf16.mxu0 0
    %396 = vmatpush1.bf16.msra.mxu0 %v373
    %397 = vmatprep.subr.bf16.mxu0 0
    %398 = vmatpush2.bf16.msra.mxu0 0
    %399 = vmatprep.subr.bf16.mxu0 0
    %400 = vmatpush2.bf16.msra.mxu0 0
    %401 = vmatprep.subr.bf16.mxu0 0
    %402 = vmatpush2.bf16.msra.mxu0 0
    %403 = vmatprep.subr.bf16.mxu0 0
    %404 = vmatpush2.bf16.msra.mxu0 0
    %405 = vmatprep.subr.bf16.mxu0 0
    %406 = vmatpush2.bf16.msra.mxu0 0
    %407 = vmatprep.subr.bf16.mxu0 0
    %408 = vmatpush2.bf16.msra.mxu0 0
    %409 = vmatprep.subr.bf16.mxu0 0
    %410 = vmatpush2.bf16.msra.mxu0 0
    %411 = vmatprep.subr.bf16.mxu0 0
    %412 = vmatpush2.bf16.msra.mxu0 0
    %413 = vmatprep.mubr.bf16.mxu0 0
    %414 = vmatmul.mubr.bf16.gmra.mxu0 %v376
    %v415 = vpop.f32.mrf.mxu0
    %v416 = vadd.f32 %v368, %v415
    %v417 = vpop.f32.mrf.mxu0
    %v418 = vpop.f32.mrf.mxu0
    %v419 = vadd.f32 %v368, %v418
    %v420 = vpop.f32.mrf.mxu0
    %421 = vmatprep.mubr.bf16.mxu0 0
    %422 = vmatmul.mubr.bf16.gmra.mxu0 %v379
    %v423 = vpop.f32.mrf.mxu0
    %v424 = vadd.f32 %v368, %v423
    %v425 = vpop.f32.mrf.mxu0
    %v426 = vpop.f32.mrf.mxu0
    %v427 = vpop.f32.mrf.mxu0
    %428 = vdwg.mxu0
    %v429 = vadd.f32 %v416, %v34
    %v430 = vadd.f32 %v419, %v35
    %v431 = vadd.f32 %v424, %v36
    %v432 = vsel %vm63, %v429, 0.0
    %433 = vadd.xlane.f32.xlu0 %v432
    %v434 = vpop.xlane.xlu0 %433
    %v435 = vsel %vm63, %v430, 0.0
    %436 = vadd.xlane.f32.xlu0 %v435
    %v437 = vpop.xlane.xlu0 %436
    %vm438 = vcmask 257024
    %v439 = vsel %vm438, %v431, 0.0
    %440 = vadd.xlane.f32.xlu0 %v439
    %v441 = vpop.xlane.xlu0 %440
    %v442 = vrcp.pop 32.0
    %v443 = vmul.f32 %v434, %v442
    %v444 = vmul.f32 %v437, %v442
    %v445 = vmul.f32 %v441, %v442
    %v446 = vsub.f32 %v429, %v443
    %v447 = vsub.f32 %v430, %v444
    %v448 = vsub.f32 %v431, %v445
    %v449 = vmul.f32 %v446, %v446
    %v450 = vmul.f32 %v447, %v447
    %v451 = vmul.f32 %v448, %v448
    %v452 = vsel %vm63, %v449, 0.0
    %453 = vadd.xlane.f32.xlu0 %v452
    %v454 = vpop.xlane.xlu0 %453
    %v455 = vsel %vm63, %v450, 0.0
    %456 = vadd.xlane.f32.xlu0 %v455
    %v457 = vpop.xlane.xlu0 %456
    %v458 = vsel %vm438, %v451, 0.0
    %459 = vadd.xlane.f32.xlu0 %v458
    %v460 = vpop.xlane.xlu0 %459
    %v461 = vmul.f32 %v454, %v442
    %v462 = vmul.f32 %v457, %v442
    %v463 = vmul.f32 %v460, %v442
    %v464 = vadd.f32 %v461, 1e-05
    %v465 = vadd.f32 %v462, 1e-05
    %v466 = vadd.f32 %v463, 1e-05
    %v467 = vrsqrt.pop %v464
    %v468 = vrsqrt.pop %v465
    %v469 = vrsqrt.pop %v466
    %v470 = vmul.f32 %v446, %v467
    %v471 = vmul.f32 %v447, %v468
    %v472 = vmul.f32 %v448, %v469
    %v473 = vlaneseq
    %v474 = vshrl.u32 %v473, 7
    %v475 = vsub.s32 2, %v474
    %v476 = vrot.slane %v40, %v475
    %v477 = vmul.f32 %v470, %v476
    %v478 = vmul.f32 %v471, %v476
    %v479 = vmul.f32 %v472, %v476
    %v480 = vlaneseq
    %v481 = vshrl.u32 %v480, 7
    %v482 = vsub.s32 3, %v481
    %v483 = vrot.slane %v40, %v482
    %v484 = vadd.f32 %v477, %v483
    %v485 = vadd.f32 %v478, %v483
    %v486 = vadd.f32 %v479, %v483
    %v487 = vpack.c.bf16 %v485, %v484
    %v488 = vpack.c.bf16 %v486, %v486
    %v489 = vld [vmem:[%s4] sm:$0xf]
    %v490 = vld [vmem:[%s4 + $0x4] sm:$0xf]
    %v491 = vld [vmem:[%s4 + $0x8] sm:$0xf]
    %v492 = vld [vmem:[%s4 + $0xc] sm:$0xf]
    %v493 = vlaneseq
    %v494 = vshrl.u32 %v493, 7
    %v495 = vsub.s32 4, %v494
    %v496 = vrot.slane %v40, %v495
    %v501 = vunpack.c.l.b16 %v489
    %v502 = vunpack.c.l.b16 %v490
    %v503 = vunpack.c.l.b16 %v491
    %v504 = vunpack.c.l.b16 %v492
    %v505 = vpack.c.b16 %v502, %v501
    %v506 = vpack.c.b16 %v504, %v503
    %v510 = vsel %vm63, %v487, 0
    %v513 = vsel %vm63, %v488, 0
    %515 = vmatprep.subr.bf16.mxu0 0
    %516 = vmatpush1.bf16.msra.mxu0 0
    %517 = vmatprep.subr.bf16.mxu0 0
    %518 = vmatpush1.bf16.msra.mxu0 0
    %519 = vmatprep.subr.bf16.mxu0 0
    %520 = vmatpush1.bf16.msra.mxu0 0
    %521 = vmatprep.subr.bf16.mxu0 0
    %522 = vmatpush1.bf16.msra.mxu0 0
    %523 = vmatprep.subr.bf16.mxu0 0
    %524 = vmatpush1.bf16.msra.mxu0 0
    %525 = vmatprep.subr.bf16.mxu0 0
    %526 = vmatpush1.bf16.msra.mxu0 0
    %527 = vmatprep.subr.bf16.mxu0 0
    %528 = vmatpush1.bf16.msra.mxu0 %v506
    %529 = vmatprep.subr.bf16.mxu0 0
    %530 = vmatpush1.bf16.msra.mxu0 %v505
    %531 = vmatprep.subr.bf16.mxu0 0
    %532 = vmatpush2.bf16.msra.mxu0 0
    %533 = vmatprep.subr.bf16.mxu0 0
    %534 = vmatpush2.bf16.msra.mxu0 0
    %535 = vmatprep.subr.bf16.mxu0 0
    %536 = vmatpush2.bf16.msra.mxu0 0
    %537 = vmatprep.subr.bf16.mxu0 0
    %538 = vmatpush2.bf16.msra.mxu0 0
    %539 = vmatprep.subr.bf16.mxu0 0
    %540 = vmatpush2.bf16.msra.mxu0 0
    %541 = vmatprep.subr.bf16.mxu0 0
    %542 = vmatpush2.bf16.msra.mxu0 0
    %543 = vmatprep.subr.bf16.mxu0 0
    %544 = vmatpush2.bf16.msra.mxu0 0
    %545 = vmatprep.subr.bf16.mxu0 0
    %546 = vmatpush2.bf16.msra.mxu0 0
    %547 = vmatprep.mubr.bf16.mxu0 0
    %548 = vmatmul.mubr.bf16.gmra.mxu0 %v510
    %v549 = vpop.f32.mrf.mxu0
    %v550 = vadd.f32 %v496, %v549
    %v551 = vpop.f32.mrf.mxu0
    %v552 = vpop.f32.mrf.mxu0
    %v553 = vadd.f32 %v496, %v552
    %v554 = vpop.f32.mrf.mxu0
    %555 = vmatprep.mubr.bf16.mxu0 0
    %556 = vmatmul.mubr.bf16.gmra.mxu0 %v513
    %v557 = vpop.f32.mrf.mxu0
    %v558 = vadd.f32 %v496, %v557
    %v559 = vpop.f32.mrf.mxu0
    %v560 = vpop.f32.mrf.mxu0
    %v561 = vpop.f32.mrf.mxu0
    %562 = vdwg.mxu0
    %v563 = vmax.f32 %v550, 0.0
    %v564 = vmax.f32 %v553, 0.0
    %v565 = vmax.f32 %v558, 0.0
    %v566 = vpack.c.bf16 %v564, %v563
    %v567 = vpack.c.bf16 %v565, %v565
    %v568 = vld [vmem:[%s5] sm:$0xf]
    %v569 = vld [vmem:[%s5 + $0x4] sm:$0xf]
    %v570 = vld [vmem:[%s5 + $0x8] sm:$0xf]
    %v571 = vld [vmem:[%s5 + $0xc] sm:$0xf]
    %v572 = vld [vmem:[%s5 + $0x10] sm:$0xf]
    %v573 = vld [vmem:[%s5 + $0x14] sm:$0xf]
    %v574 = vld [vmem:[%s5 + $0x18] sm:$0xf]
    %v575 = vld [vmem:[%s5 + $0x1c] sm:$0xf]
    %v576 = vlaneseq
    %v577 = vshrl.u32 %v576, 7
    %v578 = vsub.s32 5, %v577
    %v579 = vrot.slane %v40, %v578
    %v588 = vunpack.c.l.b16 %v568
    %v589 = vunpack.c.l.b16 %v569
    %v590 = vunpack.c.l.b16 %v570
    %v591 = vunpack.c.l.b16 %v571
    %v592 = vunpack.c.l.b16 %v572
    %v593 = vunpack.c.l.b16 %v573
    %v594 = vunpack.c.l.b16 %v574
    %v595 = vunpack.c.l.b16 %v575
    %v596 = vpack.c.b16 %v589, %v588
    %v597 = vpack.c.b16 %v591, %v590
    %v598 = vpack.c.b16 %v593, %v592
    %v599 = vpack.c.b16 %v595, %v594
    %vm604 = vcmask 523264
    %v606 = vsel %vm604, %v566, 0
    %v609 = vsel %vm604, %v567, 0
    %611 = vmatprep.subr.bf16.mxu0 0
    %612 = vmatpush1.bf16.msra.mxu0 0
    %613 = vmatprep.subr.bf16.mxu0 0
    %614 = vmatpush1.bf16.msra.mxu0 0
    %615 = vmatprep.subr.bf16.mxu0 0
    %616 = vmatpush1.bf16.msra.mxu0 0
    %617 = vmatprep.subr.bf16.mxu0 0
    %618 = vmatpush1.bf16.msra.mxu0 0
    %619 = vmatprep.subr.bf16.mxu0 0
    %620 = vmatpush1.bf16.msra.mxu0 %v599
    %621 = vmatprep.subr.bf16.mxu0 0
    %622 = vmatpush1.bf16.msra.mxu0 %v598
    %623 = vmatprep.subr.bf16.mxu0 0
    %624 = vmatpush1.bf16.msra.mxu0 %v597
    %625 = vmatprep.subr.bf16.mxu0 0
    %626 = vmatpush1.bf16.msra.mxu0 %v596
    %627 = vmatprep.subr.bf16.mxu0 0
    %628 = vmatpush2.bf16.msra.mxu0 0
    %629 = vmatprep.subr.bf16.mxu0 0
    %630 = vmatpush2.bf16.msra.mxu0 0
    %631 = vmatprep.subr.bf16.mxu0 0
    %632 = vmatpush2.bf16.msra.mxu0 0
    %633 = vmatprep.subr.bf16.mxu0 0
    %634 = vmatpush2.bf16.msra.mxu0 0
    %635 = vmatprep.subr.bf16.mxu0 0
    %636 = vmatpush2.bf16.msra.mxu0 0
    %637 = vmatprep.subr.bf16.mxu0 0
    %638 = vmatpush2.bf16.msra.mxu0 0
    %639 = vmatprep.subr.bf16.mxu0 0
    %640 = vmatpush2.bf16.msra.mxu0 0
    %641 = vmatprep.subr.bf16.mxu0 0
    %642 = vmatpush2.bf16.msra.mxu0 0
    %643 = vmatprep.mubr.bf16.mxu0 0
    %644 = vmatmul.mubr.bf16.gmra.mxu0 %v606
    %v645 = vpop.f32.mrf.mxu0
    %v646 = vadd.f32 %v579, %v645
    %v647 = vpop.f32.mrf.mxu0
    %v648 = vpop.f32.mrf.mxu0
    %v649 = vadd.f32 %v579, %v648
    %v650 = vpop.f32.mrf.mxu0
    %651 = vmatprep.mubr.bf16.mxu0 0
    %652 = vmatmul.mubr.bf16.gmra.mxu0 %v609
    %v653 = vpop.f32.mrf.mxu0
    %v654 = vadd.f32 %v579, %v653
    %v655 = vpop.f32.mrf.mxu0
    %v656 = vpop.f32.mrf.mxu0
    %v657 = vpop.f32.mrf.mxu0
    %658 = vdwg.mxu0
    %v659 = vadd.f32 %v646, %v484
    %v660 = vadd.f32 %v649, %v485
    %v661 = vadd.f32 %v654, %v486
    %v662 = vsel %vm63, %v659, 0.0
    %663 = vadd.xlane.f32.xlu0 %v662
    %v664 = vpop.xlane.xlu0 %663
    %v665 = vsel %vm63, %v660, 0.0
    %666 = vadd.xlane.f32.xlu0 %v665
    %v667 = vpop.xlane.xlu0 %666
    %v668 = vsel %vm438, %v661, 0.0
    %669 = vadd.xlane.f32.xlu0 %v668
    %v670 = vpop.xlane.xlu0 %669
    %v671 = vmul.f32 %v664, %v442
    %v672 = vmul.f32 %v667, %v442
    %v673 = vmul.f32 %v670, %v442
    %v674 = vsub.f32 %v659, %v671
    %v675 = vsub.f32 %v660, %v672
    %v676 = vsub.f32 %v661, %v673
    %v677 = vmul.f32 %v674, %v674
    %v678 = vmul.f32 %v675, %v675
    %v679 = vmul.f32 %v676, %v676
    %v680 = vsel %vm63, %v677, 0.0
    %681 = vadd.xlane.f32.xlu0 %v680
    %v682 = vpop.xlane.xlu0 %681
    %v683 = vsel %vm63, %v678, 0.0
    %684 = vadd.xlane.f32.xlu0 %v683
    %v685 = vpop.xlane.xlu0 %684
    %v686 = vsel %vm438, %v679, 0.0
    %687 = vadd.xlane.f32.xlu0 %v686
    %v688 = vpop.xlane.xlu0 %687
    %v689 = vmul.f32 %v682, %v442
    %v690 = vmul.f32 %v685, %v442
    %v691 = vmul.f32 %v688, %v442
    %v692 = vadd.f32 %v689, 1e-05
    %v693 = vadd.f32 %v690, 1e-05
    %v694 = vadd.f32 %v691, 1e-05
    %v695 = vrsqrt.pop %v692
    %v696 = vrsqrt.pop %v693
    %v697 = vrsqrt.pop %v694
    %v698 = vmul.f32 %v674, %v695
    %v699 = vmul.f32 %v675, %v696
    %v700 = vmul.f32 %v676, %v697
    %v701 = vlaneseq
    %v702 = vshrl.u32 %v701, 7
    %v703 = vsub.s32 6, %v702
    %v704 = vrot.slane %v40, %v703
    %v705 = vmul.f32 %v698, %v704
    %v706 = vmul.f32 %v699, %v704
    %v707 = vmul.f32 %v700, %v704
    %v708 = vlaneseq
    %v709 = vshrl.u32 %v708, 7
    %v710 = vsub.s32 7, %v709
    %v711 = vrot.slane %v40, %v710
    %v712 = vadd.f32 %v705, %v711
    %v713 = vadd.f32 %v706, %v711
    %v714 = vadd.f32 %v707, %v711
    %s715 = scalar_lea.vmem %s6, 8
    %v716 = vld [vmem:[%s715] sm:$0xff]
    %v717 = vpack.c.bf16 %v713, %v712
    %v718 = vpack.c.bf16 %v714, %v714
    %s719 = scalar_lea.vmem %s2, 16
    %v720 = vld [vmem:[%s719] sm:$0xf]
    %v721 = vld [vmem:[%s719 + $0x4] sm:$0xf]
    %v722 = vld [vmem:[%s719 + $0x8] sm:$0xf]
    %v723 = vld [vmem:[%s719 + $0xc] sm:$0xf]
    %v724 = vlaneseq
    %v725 = vshrl.u32 %v724, 7
    %v726 = vsub.s32 0, %v725
    %v727 = vrot.slane %v716, %v726
    %v732 = vunpack.c.l.b16 %v720
    %v733 = vunpack.c.l.b16 %v721
    %v734 = vunpack.c.l.b16 %v722
    %v735 = vunpack.c.l.b16 %v723
    %v736 = vpack.c.b16 %v733, %v732
    %v737 = vpack.c.b16 %v735, %v734
    %v741 = vsel %vm63, %v717, 0
    %v744 = vsel %vm63, %v718, 0
    %746 = vmatprep.subr.bf16.mxu0 0
    %747 = vmatpush1.bf16.msra.mxu0 0
    %748 = vmatprep.subr.bf16.mxu0 0
    %749 = vmatpush1.bf16.msra.mxu0 0
    %750 = vmatprep.subr.bf16.mxu0 0
    %751 = vmatpush1.bf16.msra.mxu0 0
    %752 = vmatprep.subr.bf16.mxu0 0
    %753 = vmatpush1.bf16.msra.mxu0 0
    %754 = vmatprep.subr.bf16.mxu0 0
    %755 = vmatpush1.bf16.msra.mxu0 0
    %756 = vmatprep.subr.bf16.mxu0 0
    %757 = vmatpush1.bf16.msra.mxu0 0
    %758 = vmatprep.subr.bf16.mxu0 0
    %759 = vmatpush1.bf16.msra.mxu0 %v737
    %760 = vmatprep.subr.bf16.mxu0 0
    %761 = vmatpush1.bf16.msra.mxu0 %v736
    %762 = vmatprep.subr.bf16.mxu0 0
    %763 = vmatpush2.bf16.msra.mxu0 0
    %764 = vmatprep.subr.bf16.mxu0 0
    %765 = vmatpush2.bf16.msra.mxu0 0
    %766 = vmatprep.subr.bf16.mxu0 0
    %767 = vmatpush2.bf16.msra.mxu0 0
    %768 = vmatprep.subr.bf16.mxu0 0
    %769 = vmatpush2.bf16.msra.mxu0 0
    %770 = vmatprep.subr.bf16.mxu0 0
    %771 = vmatpush2.bf16.msra.mxu0 0
    %772 = vmatprep.subr.bf16.mxu0 0
    %773 = vmatpush2.bf16.msra.mxu0 0
    %774 = vmatprep.subr.bf16.mxu0 0
    %775 = vmatpush2.bf16.msra.mxu0 0
    %776 = vmatprep.subr.bf16.mxu0 0
    %777 = vmatpush2.bf16.msra.mxu0 0
    %778 = vmatprep.mubr.bf16.mxu0 0
    %779 = vmatmul.mubr.bf16.gmra.mxu0 %v741
    %v780 = vpop.f32.mrf.mxu0
    %v781 = vadd.f32 %v727, %v780
    %v782 = vpop.f32.mrf.mxu0
    %v783 = vpop.f32.mrf.mxu0
    %v784 = vadd.f32 %v727, %v783
    %v785 = vpop.f32.mrf.mxu0
    %786 = vmatprep.mubr.bf16.mxu0 0
    %787 = vmatmul.mubr.bf16.gmra.mxu0 %v744
    %v788 = vpop.f32.mrf.mxu0
    %v789 = vadd.f32 %v727, %v788
    %v790 = vpop.f32.mrf.mxu0
    %v791 = vpop.f32.mrf.mxu0
    %v792 = vpop.f32.mrf.mxu0
    %793 = vdwg.mxu0
    %797 = vrot.lane.b32.xlu0 %v781, 112
    %v798 = vpop.permute.xlu0 %797
    %799 = vrot.lane.b32.xlu0 %v784, 112
    %v800 = vpop.permute.xlu0 %799
    %801 = vrot.lane.b32.xlu0 %v789, 112
    %v802 = vpop.permute.xlu0 %801
    %v803 = vsel %vm127, %v781, 0
    %v805 = vsel %vm127, %v784, 0
    %v807 = vsel %vm127, %v789, 0
    %v809 = vsel %vm127, %v798, 0
    %v811 = vsel %vm127, %v800, 0
    %v813 = vsel %vm127, %v802, 0
    %815 = vmatprep.subr.mxu0 0.0
    %816 = vmatpush1.xpose.msra.mxu0 0.0
    %817 = vmatprep.subr.mxu0 0.0
    %818 = vmatpush1.xpose.msra.mxu0 0.0
    %819 = vmatprep.subr.mxu0 0.0
    %820 = vmatpush1.xpose.msra.mxu0 0.0
    %821 = vmatprep.subr.mxu0 0.0
    %822 = vmatpush1.xpose.msra.mxu0 0.0
    %823 = vmatprep.subr.mxu0 0.0
    %824 = vmatpush1.xpose.msra.mxu0 0.0
    %825 = vmatprep.subr.mxu0 0.0
    %826 = vmatpush1.xpose.msra.mxu0 0.0
    %827 = vmatprep.subr.mxu0 0.0
    %828 = vmatpush1.xpose.msra.mxu0 0.0
    %829 = vmatprep.subr.mxu0 0.0
    %830 = vmatpush1.xpose.msra.mxu0 0.0
    %831 = vmatprep.subr.mxu0 0.0
    %832 = vmatpush1.xpose.msra.mxu0 0.0
    %833 = vmatprep.subr.mxu0 0.0
    %834 = vmatpush1.xpose.msra.mxu0 0.0
    %835 = vmatprep.subr.mxu0 0.0
    %836 = vmatpush1.xpose.msra.mxu0 0.0
    %837 = vmatprep.subr.mxu0 0.0
    %838 = vmatpush1.xpose.msra.mxu0 0.0
    %839 = vmatprep.subr.mxu0 0.0
    %840 = vmatpush1.xpose.msra.mxu0 0.0
    %841 = vmatprep.subr.mxu0 0.0
    %842 = vmatpush1.xpose.msra.mxu0 %v813
    %843 = vmatprep.subr.mxu0 0.0
    %844 = vmatpush1.xpose.msra.mxu0 %v811
    %845 = vmatprep.subr.mxu0 0.0
    %846 = vmatpush1.xpose.msra.mxu0 %v809
    %847 = vmatprep.subr.mxu0 0.0
    %848 = vmatpush2.xpose.msra.mxu0 0.0
    %849 = vmatprep.subr.mxu0 0.0
    %850 = vmatpush2.xpose.msra.mxu0 0.0
    %851 = vmatprep.subr.mxu0 0.0
    %852 = vmatpush2.xpose.msra.mxu0 0.0
    %853 = vmatprep.subr.mxu0 0.0
    %854 = vmatpush2.xpose.msra.mxu0 0.0
    %855 = vmatprep.subr.mxu0 0.0
    %856 = vmatpush2.xpose.msra.mxu0 0.0
    %857 = vmatprep.subr.mxu0 0.0
    %858 = vmatpush2.xpose.msra.mxu0 0.0
    %859 = vmatprep.subr.mxu0 0.0
    %860 = vmatpush2.xpose.msra.mxu0 0.0
    %861 = vmatprep.subr.mxu0 0.0
    %862 = vmatpush2.xpose.msra.mxu0 0.0
    %863 = vmatprep.subr.mxu0 0.0
    %864 = vmatpush2.xpose.msra.mxu0 0.0
    %865 = vmatprep.subr.mxu0 0.0
    %866 = vmatpush2.xpose.msra.mxu0 0.0
    %867 = vmatprep.subr.mxu0 0.0
    %868 = vmatpush2.xpose.msra.mxu0 0.0
    %869 = vmatprep.subr.mxu0 0.0
    %870 = vmatpush2.xpose.msra.mxu0 0.0
    %871 = vmatprep.subr.mxu0 0.0
    %872 = vmatpush2.xpose.msra.mxu0 0.0
    %873 = vmatprep.subr.mxu0 0.0
    %874 = vmatpush2.xpose.msra.mxu0 0.0
    %875 = vmatprep.subr.mxu0 0.0
    %876 = vmatpush2.xpose.msra.mxu0 0.0
    %877 = vmatprep.subr.mxu0 0.0
    %878 = vmatpush2.xpose.msra.mxu0 0.0
    %879 = vmatprep.mubr.f32.mxu0 0.0
    %880 = vmatmul.mubr.f32.gmra.mxu0 %v803
    %v881 = vpop.f32.mrf.mxu0
    %v882 = vadd.f32 0.0, %v881
    %v883 = vpop.f32.mrf.mxu0
    %884 = vmatprep.mubr.f32.mxu0 0.0
    %885 = vmatmul.mubr.f32.gmra.mxu0 %v805
    %v886 = vpop.f32.mrf.mxu0
    %v887 = vadd.f32 0.0, %v886
    %v888 = vpop.f32.mrf.mxu0
    %889 = vmatprep.mubr.f32.mxu0 0.0
    %890 = vmatmul.mubr.f32.gmra.mxu0 %v807
    %v891 = vpop.f32.mrf.mxu0
    %v892 = vadd.f32 0.0, %v891
    %v893 = vpop.f32.mrf.mxu0
    %894 = vdwg.mxu0
    %v895 = vmul.f32 %v882, 0.25
    %v896 = vmul.f32 %v887, 0.25
    %v897 = vmul.f32 %v892, 0.25
    %v898 = vadd.f32 %v895, %v37
    %v899 = vadd.f32 %v896, %v38
    %v900 = vadd.f32 %v897, %v39
    %v901 = vsel %vm226, %v898, -inf
    %902 = vmax.xlane.f32.xlu0 %v901
    %v903 = vpop.xlane.xlu0 %902
    %v904 = vsel %vm226, %v899, -inf
    %905 = vmax.xlane.f32.xlu0 %v904
    %v906 = vpop.xlane.xlu0 %905
    %v907 = vsel %vm233, %v900, -inf
    %908 = vmax.xlane.f32.xlu0 %v907
    %v909 = vpop.xlane.xlu0 %908
    %v910 = vsub.f32 %v898, %v903
    %v911 = vsub.f32 %v899, %v906
    %v912 = vsub.f32 %v900, %v909
    %v913 = vmul.f32 %v910, 1.442695
    %v914 = vpow.pop %v913
    %v915 = vmul.f32 %v911, 1.442695
    %v916 = vpow.pop %v915
    %v917 = vmul.f32 %v912, 1.442695
    %v918 = vpow.pop %v917
    %v919 = vsel %vm226, %v914, 0.0
    %920 = vadd.xlane.f32.xlu0 %v919
    %v921 = vpop.xlane.xlu0 %920
    %v922 = vsel %vm226, %v916, 0.0
    %923 = vadd.xlane.f32.xlu0 %v922
    %v924 = vpop.xlane.xlu0 %923
    %v925 = vsel %vm233, %v918, 0.0
    %926 = vadd.xlane.f32.xlu0 %v925
    %v927 = vpop.xlane.xlu0 %926
    %v928 = vrcp.pop %v921
    %v929 = vrcp.pop %v924
    %v930 = vrcp.pop %v927
    %v931 = vmul.f32 %v914, %v928
    %v932 = vmul.f32 %v916, %v929
    %v933 = vmul.f32 %v918, %v930
    %934 = vrot.lane.b32.xlu0 %v781, 96
    %v935 = vpop.permute.xlu0 %934
    %936 = vrot.lane.b32.xlu0 %v784, 96
    %v937 = vpop.permute.xlu0 %936
    %938 = vrot.lane.b32.xlu0 %v789, 96
    %v939 = vpop.permute.xlu0 %938
    %v943 = vsel %vm226, %v931, 0
    %v946 = vsel %vm226, %v932, 0
    %v949 = vsel %vm226, %v933, 0
    %v951 = vsel %vm278, %v939, 0
    %953 = vmatprep.subr.mxu0 0.0
    %954 = vmatpush1.msra.mxu0 0.0
    %955 = vmatprep.subr.mxu0 0.0
    %956 = vmatpush1.msra.mxu0 0.0
    %957 = vmatprep.subr.mxu0 0.0
    %958 = vmatpush1.msra.mxu0 0.0
    %959 = vmatprep.subr.mxu0 0.0
    %960 = vmatpush1.msra.mxu0 0.0
    %961 = vmatprep.subr.mxu0 0.0
    %962 = vmatpush1.msra.mxu0 0.0
    %963 = vmatprep.subr.mxu0 0.0
    %964 = vmatpush1.msra.mxu0 0.0
    %965 = vmatprep.subr.mxu0 0.0
    %966 = vmatpush1.msra.mxu0 0.0
    %967 = vmatprep.subr.mxu0 0.0
    %968 = vmatpush1.msra.mxu0 0.0
    %969 = vmatprep.subr.mxu0 0.0
    %970 = vmatpush1.msra.mxu0 0.0
    %971 = vmatprep.subr.mxu0 0.0
    %972 = vmatpush1.msra.mxu0 0.0
    %973 = vmatprep.subr.mxu0 0.0
    %974 = vmatpush1.msra.mxu0 0.0
    %975 = vmatprep.subr.mxu0 0.0
    %976 = vmatpush1.msra.mxu0 0.0
    %977 = vmatprep.subr.mxu0 0.0
    %978 = vmatpush1.msra.mxu0 0.0
    %979 = vmatprep.subr.mxu0 0.0
    %980 = vmatpush1.msra.mxu0 %v951
    %981 = vmatprep.subr.mxu0 0.0
    %982 = vmatpush1.msra.mxu0 %v937
    %983 = vmatprep.subr.mxu0 0.0
    %984 = vmatpush1.msra.mxu0 %v935
    %985 = vmatprep.subr.mxu0 0.0
    %986 = vmatpush2.msra.mxu0 0.0
    %987 = vmatprep.subr.mxu0 0.0
    %988 = vmatpush2.msra.mxu0 0.0
    %989 = vmatprep.subr.mxu0 0.0
    %990 = vmatpush2.msra.mxu0 0.0
    %991 = vmatprep.subr.mxu0 0.0
    %992 = vmatpush2.msra.mxu0 0.0
    %993 = vmatprep.subr.mxu0 0.0
    %994 = vmatpush2.msra.mxu0 0.0
    %995 = vmatprep.subr.mxu0 0.0
    %996 = vmatpush2.msra.mxu0 0.0
    %997 = vmatprep.subr.mxu0 0.0
    %998 = vmatpush2.msra.mxu0 0.0
    %999 = vmatprep.subr.mxu0 0.0
    %1000 = vmatpush2.msra.mxu0 0.0
    %1001 = vmatprep.subr.mxu0 0.0
    %1002 = vmatpush2.msra.mxu0 0.0
    %1003 = vmatprep.subr.mxu0 0.0
    %1004 = vmatpush2.msra.mxu0 0.0
    %1005 = vmatprep.subr.mxu0 0.0
    %1006 = vmatpush2.msra.mxu0 0.0
    %1007 = vmatprep.subr.mxu0 0.0
    %1008 = vmatpush2.msra.mxu0 0.0
    %1009 = vmatprep.subr.mxu0 0.0
    %1010 = vmatpush2.msra.mxu0 0.0
    %1011 = vmatprep.subr.mxu0 0.0
    %1012 = vmatpush2.msra.mxu0 0.0
    %1013 = vmatprep.subr.mxu0 0.0
    %1014 = vmatpush2.msra.mxu0 0.0
    %1015 = vmatprep.subr.mxu0 0.0
    %1016 = vmatpush2.msra.mxu0 0.0
    %1017 = vmatprep.mubr.f32.mxu0 0.0
    %1018 = vmatmul.mubr.f32.gmra.mxu0 %v943
    %v1019 = vpop.f32.mrf.mxu0
    %v1020 = vadd.f32 0.0, %v1019
    %v1021 = vpop.f32.mrf.mxu0
    %1022 = vmatprep.mubr.f32.mxu0 0.0
    %1023 = vmatmul.mubr.f32.gmra.mxu0 %v946
    %v1024 = vpop.f32.mrf.mxu0
    %v1025 = vadd.f32 0.0, %v1024
    %v1026 = vpop.f32.mrf.mxu0
    %1027 = vmatprep.mubr.f32.mxu0 0.0
    %1028 = vmatmul.mubr.f32.gmra.mxu0 %v949
    %v1029 = vpop.f32.mrf.mxu0
    %v1030 = vadd.f32 0.0, %v1029
    %v1031 = vpop.f32.mrf.mxu0
    %1032 = vdwg.mxu0
    %v1033 = vpack.c.bf16 %v1025, %v1020
    %v1034 = vpack.c.bf16 %v1030, %v1030
    %s1035 = scalar_lea.vmem %s3, 8
    %v1036 = vld [vmem:[%s1035] sm:$0xf]
    %v1037 = vld [vmem:[%s1035 + $0x4] sm:$0xf]
    %v1038 = vlaneseq
    %v1039 = vshrl.u32 %v1038, 7
    %v1040 = vsub.s32 1, %v1039
    %v1041 = vrot.slane %v716, %v1040
    %v1044 = vunpack.c.l.b16 %v1036
    %v1045 = vunpack.c.l.b16 %v1037
    %v1046 = vpack.c.b16 %v1045, %v1044
    %v1049 = vsel %vm127, %v1033, 0
    %v1052 = vsel %vm127, %v1034, 0
    %1054 = vmatprep.subr.bf16.mxu0 0
    %1055 = vmatpush1.bf16.msra.mxu0 0
    %1056 = vmatprep.subr.bf16.mxu0 0
    %1057 = vmatpush1.bf16.msra.mxu0 0
    %1058 = vmatprep.subr.bf16.mxu0 0
    %1059 = vmatpush1.bf16.msra.mxu0 0
    %1060 = vmatprep.subr.bf16.mxu0 0
    %1061 = vmatpush1.bf16.msra.mxu0 0
    %1062 = vmatprep.subr.bf16.mxu0 0
    %1063 = vmatpush1.bf16.msra.mxu0 0
    %1064 = vmatprep.subr.bf16.mxu0 0
    %1065 = vmatpush1.bf16.msra.mxu0 0
    %1066 = vmatprep.subr.bf16.mxu0 0
    %1067 = vmatpush1.bf16.msra.mxu0 0
    %1068 = vmatprep.subr.bf16.mxu0 0
    %1069 = vmatpush1.bf16.msra.mxu0 %v1046
    %1070 = vmatprep.subr.bf16.mxu0 0
    %1071 = vmatpush2.bf16.msra.mxu0 0
    %1072 = vmatprep.subr.bf16.mxu0 0
    %1073 = vmatpush2.bf16.msra.mxu0 0
    %1074 = vmatprep.subr.bf16.mxu0 0
    %1075 = vmatpush2.bf16.msra.mxu0 0
    %1076 = vmatprep.subr.bf16.mxu0 0
    %1077 = vmatpush2.bf16.msra.mxu0 0
    %1078 = vmatprep.subr.bf16.mxu0 0
    %1079 = vmatpush2.bf16.msra.mxu0 0
    %1080 = vmatprep.subr.bf16.mxu0 0
    %1081 = vmatpush2.bf16.msra.mxu0 0
    %1082 = vmatprep.subr.bf16.mxu0 0
    %1083 = vmatpush2.bf16.msra.mxu0 0
    %1084 = vmatprep.subr.bf16.mxu0 0
    %1085 = vmatpush2.bf16.msra.mxu0 0
    %1086 = vmatprep.mubr.bf16.mxu0 0
    %1087 = vmatmul.mubr.bf16.gmra.mxu0 %v1049
    %v1088 = vpop.f32.mrf.mxu0
    %v1089 = vadd.f32 %v1041, %v1088
    %v1090 = vpop.f32.mrf.mxu0
    %v1091 = vpop.f32.mrf.mxu0
    %v1092 = vadd.f32 %v1041, %v1091
    %v1093 = vpop.f32.mrf.mxu0
    %1094 = vmatprep.mubr.bf16.mxu0 0
    %1095 = vmatmul.mubr.bf16.gmra.mxu0 %v1052
    %v1096 = vpop.f32.mrf.mxu0
    %v1097 = vadd.f32 %v1041, %v1096
    %v1098 = vpop.f32.mrf.mxu0
    %v1099 = vpop.f32.mrf.mxu0
    %v1100 = vpop.f32.mrf.mxu0
    %1101 = vdwg.mxu0
    %v1102 = vadd.f32 %v1089, %v712
    %v1103 = vadd.f32 %v1092, %v713
    %v1104 = vadd.f32 %v1097, %v714
    %v1105 = vsel %vm63, %v1102, 0.0
    %1106 = vadd.xlane.f32.xlu0 %v1105
    %v1107 = vpop.xlane.xlu0 %1106
    %v1108 = vsel %vm63, %v1103, 0.0
    %1109 = vadd.xlane.f32.xlu0 %v1108
    %v1110 = vpop.xlane.xlu0 %1109
    %v1111 = vsel %vm438, %v1104, 0.0
    %1112 = vadd.xlane.f32.xlu0 %v1111
    %v1113 = vpop.xlane.xlu0 %1112
    %v1114 = vmul.f32 %v1107, %v442
    %v1115 = vmul.f32 %v1110, %v442
    %v1116 = vmul.f32 %v1113, %v442
    %v1117 = vsub.f32 %v1102, %v1114
    %v1118 = vsub.f32 %v1103, %v1115
    %v1119 = vsub.f32 %v1104, %v1116
    %v1120 = vmul.f32 %v1117, %v1117
    %v1121 = vmul.f32 %v1118, %v1118
    %v1122 = vmul.f32 %v1119, %v1119
    %v1123 = vsel %vm63, %v1120, 0.0
    %1124 = vadd.xlane.f32.xlu0 %v1123
    %v1125 = vpop.xlane.xlu0 %1124
    %v1126 = vsel %vm63, %v1121, 0.0
    %1127 = vadd.xlane.f32.xlu0 %v1126
    %v1128 = vpop.xlane.xlu0 %1127
    %v1129 = vsel %vm438, %v1122, 0.0
    %1130 = vadd.xlane.f32.xlu0 %v1129
    %v1131 = vpop.xlane.xlu0 %1130
    %v1132 = vmul.f32 %v1125, %v442
    %v1133 = vmul.f32 %v1128, %v442
    %v1134 = vmul.f32 %v1131, %v442
    %v1135 = vadd.f32 %v1132, 1e-05
    %v1136 = vadd.f32 %v1133, 1e-05
    %v1137 = vadd.f32 %v1134, 1e-05
    %v1138 = vrsqrt.pop %v1135
    %v1139 = vrsqrt.pop %v1136
    %v1140 = vrsqrt.pop %v1137
    %v1141 = vmul.f32 %v1117, %v1138
    %v1142 = vmul.f32 %v1118, %v1139
    %v1143 = vmul.f32 %v1119, %v1140
    %v1144 = vlaneseq
    %v1145 = vshrl.u32 %v1144, 7
    %v1146 = vsub.s32 2, %v1145
    %v1147 = vrot.slane %v716, %v1146
    %v1148 = vmul.f32 %v1141, %v1147
    %v1149 = vmul.f32 %v1142, %v1147
    %v1150 = vmul.f32 %v1143, %v1147
    %v1151 = vlaneseq
    %v1152 = vshrl.u32 %v1151, 7
    %v1153 = vsub.s32 3, %v1152
    %v1154 = vrot.slane %v716, %v1153
    %v1155 = vadd.f32 %v1148, %v1154
    %v1156 = vadd.f32 %v1149, %v1154
    %v1157 = vadd.f32 %v1150, %v1154
    %v1158 = vpack.c.bf16 %v1156, %v1155
    %v1159 = vpack.c.bf16 %v1157, %v1157
    %s1160 = scalar_lea.vmem %s4, 16
    %v1161 = vld [vmem:[%s1160] sm:$0xf]
    %v1162 = vld [vmem:[%s1160 + $0x4] sm:$0xf]
    %v1163 = vld [vmem:[%s1160 + $0x8] sm:$0xf]
    %v1164 = vld [vmem:[%s1160 + $0xc] sm:$0xf]
    %v1165 = vlaneseq
    %v1166 = vshrl.u32 %v1165, 7
    %v1167 = vsub.s32 4, %v1166
    %v1168 = vrot.slane %v716, %v1167
    %v1173 = vunpack.c.l.b16 %v1161
    %v1174 = vunpack.c.l.b16 %v1162
    %v1175 = vunpack.c.l.b16 %v1163
    %v1176 = vunpack.c.l.b16 %v1164
    %v1177 = vpack.c.b16 %v1174, %v1173
    %v1178 = vpack.c.b16 %v1176, %v1175
    %v1182 = vsel %vm63, %v1158, 0
    %v1185 = vsel %vm63, %v1159, 0
    %1187 = vmatprep.subr.bf16.mxu0 0
    %1188 = vmatpush1.bf16.msra.mxu0 0
    %1189 = vmatprep.subr.bf16.mxu0 0
    %1190 = vmatpush1.bf16.msra.mxu0 0
    %1191 = vmatprep.subr.bf16.mxu0 0
    %1192 = vmatpush1.bf16.msra.mxu0 0
    %1193 = vmatprep.subr.bf16.mxu0 0
    %1194 = vmatpush1.bf16.msra.mxu0 0
    %1195 = vmatprep.subr.bf16.mxu0 0
    %1196 = vmatpush1.bf16.msra.mxu0 0
    %1197 = vmatprep.subr.bf16.mxu0 0
    %1198 = vmatpush1.bf16.msra.mxu0 0
    %1199 = vmatprep.subr.bf16.mxu0 0
    %1200 = vmatpush1.bf16.msra.mxu0 %v1178
    %1201 = vmatprep.subr.bf16.mxu0 0
    %1202 = vmatpush1.bf16.msra.mxu0 %v1177
    %1203 = vmatprep.subr.bf16.mxu0 0
    %1204 = vmatpush2.bf16.msra.mxu0 0
    %1205 = vmatprep.subr.bf16.mxu0 0
    %1206 = vmatpush2.bf16.msra.mxu0 0
    %1207 = vmatprep.subr.bf16.mxu0 0
    %1208 = vmatpush2.bf16.msra.mxu0 0
    %1209 = vmatprep.subr.bf16.mxu0 0
    %1210 = vmatpush2.bf16.msra.mxu0 0
    %1211 = vmatprep.subr.bf16.mxu0 0
    %1212 = vmatpush2.bf16.msra.mxu0 0
    %1213 = vmatprep.subr.bf16.mxu0 0
    %1214 = vmatpush2.bf16.msra.mxu0 0
    %1215 = vmatprep.subr.bf16.mxu0 0
    %1216 = vmatpush2.bf16.msra.mxu0 0
    %1217 = vmatprep.subr.bf16.mxu0 0
    %1218 = vmatpush2.bf16.msra.mxu0 0
    %1219 = vmatprep.mubr.bf16.mxu0 0
    %1220 = vmatmul.mubr.bf16.gmra.mxu0 %v1182
    %v1221 = vpop.f32.mrf.mxu0
    %v1222 = vadd.f32 %v1168, %v1221
    %v1223 = vpop.f32.mrf.mxu0
    %v1224 = vpop.f32.mrf.mxu0
    %v1225 = vadd.f32 %v1168, %v1224
    %v1226 = vpop.f32.mrf.mxu0
    %1227 = vmatprep.mubr.bf16.mxu0 0
    %1228 = vmatmul.mubr.bf16.gmra.mxu0 %v1185
    %v1229 = vpop.f32.mrf.mxu0
    %v1230 = vadd.f32 %v1168, %v1229
    %v1231 = vpop.f32.mrf.mxu0
    %v1232 = vpop.f32.mrf.mxu0
    %v1233 = vpop.f32.mrf.mxu0
    %1234 = vdwg.mxu0
    %v1235 = vmax.f32 %v1222, 0.0
    %v1236 = vmax.f32 %v1225, 0.0
    %v1237 = vmax.f32 %v1230, 0.0
    %v1238 = vpack.c.bf16 %v1236, %v1235
    %v1239 = vpack.c.bf16 %v1237, %v1237
    %s1240 = scalar_lea.vmem %s5, 32
    %v1241 = vld [vmem:[%s1240] sm:$0xf]
    %v1242 = vld [vmem:[%s1240 + $0x4] sm:$0xf]
    %v1243 = vld [vmem:[%s1240 + $0x8] sm:$0xf]
    %v1244 = vld [vmem:[%s1240 + $0xc] sm:$0xf]
    %v1245 = vld [vmem:[%s1240 + $0x10] sm:$0xf]
    %v1246 = vld [vmem:[%s1240 + $0x14] sm:$0xf]
    %v1247 = vld [vmem:[%s1240 + $0x18] sm:$0xf]
    %v1248 = vld [vmem:[%s1240 + $0x1c] sm:$0xf]
    %v1249 = vlaneseq
    %v1250 = vshrl.u32 %v1249, 7
    %v1251 = vsub.s32 5, %v1250
    %v1252 = vrot.slane %v716, %v1251
    %v1261 = vunpack.c.l.b16 %v1241
    %v1262 = vunpack.c.l.b16 %v1242
    %v1263 = vunpack.c.l.b16 %v1243
    %v1264 = vunpack.c.l.b16 %v1244
    %v1265 = vunpack.c.l.b16 %v1245
    %v1266 = vunpack.c.l.b16 %v1246
    %v1267 = vunpack.c.l.b16 %v1247
    %v1268 = vunpack.c.l.b16 %v1248
    %v1269 = vpack.c.b16 %v1262, %v1261
    %v1270 = vpack.c.b16 %v1264, %v1263
    %v1271 = vpack.c.b16 %v1266, %v1265
    %v1272 = vpack.c.b16 %v1268, %v1267
    %v1278 = vsel %vm604, %v1238, 0
    %v1281 = vsel %vm604, %v1239, 0
    %1283 = vmatprep.subr.bf16.mxu0 0
    %1284 = vmatpush1.bf16.msra.mxu0 0
    %1285 = vmatprep.subr.bf16.mxu0 0
    %1286 = vmatpush1.bf16.msra.mxu0 0
    %1287 = vmatprep.subr.bf16.mxu0 0
    %1288 = vmatpush1.bf16.msra.mxu0 0
    %1289 = vmatprep.subr.bf16.mxu0 0
    %1290 = vmatpush1.bf16.msra.mxu0 0
    %1291 = vmatprep.subr.bf16.mxu0 0
    %1292 = vmatpush1.bf16.msra.mxu0 %v1272
    %1293 = vmatprep.subr.bf16.mxu0 0
    %1294 = vmatpush1.bf16.msra.mxu0 %v1271
    %1295 = vmatprep.subr.bf16.mxu0 0
    %1296 = vmatpush1.bf16.msra.mxu0 %v1270
    %1297 = vmatprep.subr.bf16.mxu0 0
    %1298 = vmatpush1.bf16.msra.mxu0 %v1269
    %1299 = vmatprep.subr.bf16.mxu0 0
    %1300 = vmatpush2.bf16.msra.mxu0 0
    %1301 = vmatprep.subr.bf16.mxu0 0
    %1302 = vmatpush2.bf16.msra.mxu0 0
    %1303 = vmatprep.subr.bf16.mxu0 0
    %1304 = vmatpush2.bf16.msra.mxu0 0
    %1305 = vmatprep.subr.bf16.mxu0 0
    %1306 = vmatpush2.bf16.msra.mxu0 0
    %1307 = vmatprep.subr.bf16.mxu0 0
    %1308 = vmatpush2.bf16.msra.mxu0 0
    %1309 = vmatprep.subr.bf16.mxu0 0
    %1310 = vmatpush2.bf16.msra.mxu0 0
    %1311 = vmatprep.subr.bf16.mxu0 0
    %1312 = vmatpush2.bf16.msra.mxu0 0
    %1313 = vmatprep.subr.bf16.mxu0 0
    %1314 = vmatpush2.bf16.msra.mxu0 0
    %1315 = vmatprep.mubr.bf16.mxu0 0
    %1316 = vmatmul.mubr.bf16.gmra.mxu0 %v1278
    %v1317 = vpop.f32.mrf.mxu0
    %v1318 = vadd.f32 %v1252, %v1317
    %v1319 = vpop.f32.mrf.mxu0
    %v1320 = vpop.f32.mrf.mxu0
    %v1321 = vadd.f32 %v1252, %v1320
    %v1322 = vpop.f32.mrf.mxu0
    %1323 = vmatprep.mubr.bf16.mxu0 0
    %1324 = vmatmul.mubr.bf16.gmra.mxu0 %v1281
    %v1325 = vpop.f32.mrf.mxu0
    %v1326 = vadd.f32 %v1252, %v1325
    %v1327 = vpop.f32.mrf.mxu0
    %v1328 = vpop.f32.mrf.mxu0
    %v1329 = vpop.f32.mrf.mxu0
    %1330 = vdwg.mxu0
    %v1331 = vadd.f32 %v1318, %v1155
    %v1332 = vadd.f32 %v1321, %v1156
    %v1333 = vadd.f32 %v1326, %v1157
    %v1334 = vsel %vm63, %v1331, 0.0
    %1335 = vadd.xlane.f32.xlu0 %v1334
    %v1336 = vpop.xlane.xlu0 %1335
    %v1337 = vsel %vm63, %v1332, 0.0
    %1338 = vadd.xlane.f32.xlu0 %v1337
    %v1339 = vpop.xlane.xlu0 %1338
    %v1340 = vsel %vm438, %v1333, 0.0
    %1341 = vadd.xlane.f32.xlu0 %v1340
    %v1342 = vpop.xlane.xlu0 %1341
    %v1343 = vmul.f32 %v1336, %v442
    %v1344 = vmul.f32 %v1339, %v442
    %v1345 = vmul.f32 %v1342, %v442
    %v1346 = vsub.f32 %v1331, %v1343
    %v1347 = vsub.f32 %v1332, %v1344
    %v1348 = vsub.f32 %v1333, %v1345
    %v1349 = vmul.f32 %v1346, %v1346
    %v1350 = vmul.f32 %v1347, %v1347
    %v1351 = vmul.f32 %v1348, %v1348
    %v1352 = vsel %vm63, %v1349, 0.0
    %1353 = vadd.xlane.f32.xlu0 %v1352
    %v1354 = vpop.xlane.xlu0 %1353
    %v1355 = vsel %vm63, %v1350, 0.0
    %1356 = vadd.xlane.f32.xlu0 %v1355
    %v1357 = vpop.xlane.xlu0 %1356
    %v1358 = vsel %vm438, %v1351, 0.0
    %1359 = vadd.xlane.f32.xlu0 %v1358
    %v1360 = vpop.xlane.xlu0 %1359
    %v1361 = vmul.f32 %v1354, %v442
    %v1362 = vmul.f32 %v1357, %v442
    %v1363 = vmul.f32 %v1360, %v442
    %v1364 = vadd.f32 %v1361, 1e-05
    %v1365 = vadd.f32 %v1362, 1e-05
    %v1366 = vadd.f32 %v1363, 1e-05
    %v1367 = vrsqrt.pop %v1364
    %v1368 = vrsqrt.pop %v1365
    %v1369 = vrsqrt.pop %v1366
    %v1370 = vmul.f32 %v1346, %v1367
    %v1371 = vmul.f32 %v1347, %v1368
    %v1372 = vmul.f32 %v1348, %v1369
    %v1373 = vlaneseq
    %v1374 = vshrl.u32 %v1373, 7
    %v1375 = vsub.s32 6, %v1374
    %v1376 = vrot.slane %v716, %v1375
    %v1377 = vmul.f32 %v1370, %v1376
    %v1378 = vmul.f32 %v1371, %v1376
    %v1379 = vmul.f32 %v1372, %v1376
    %v1380 = vlaneseq
    %v1381 = vshrl.u32 %v1380, 7
    %v1382 = vsub.s32 7, %v1381
    %v1383 = vrot.slane %v716, %v1382
    %v1384 = vadd.f32 %v1377, %v1383
    %v1385 = vadd.f32 %v1378, %v1383
    %v1386 = vadd.f32 %v1379, %v1383
    %v1387 = vpack.c.bf16 %v1385, %v1384
    %v1388 = vpack.c.bf16 %v1386, %v1386
    %v1389 = vld [vmem:[%s7] sm:$0xf]
    %v1390 = vld [vmem:[%s7 + $0x4] sm:$0xf]
    %v1391 = vld [vmem:[%s7 + $0x8] sm:$0xf]
    %v1392 = vld [vmem:[%s7 + $0xc] sm:$0xf]
    %v1393 = vld [vmem:[%s8] sm:$0x1]
    %v1395 = vlaneseq
    %v1396 = vshrl.u32 %v1395, 7
    %v1397 = vsub.s32 0, %v1396
    %v1398 = vrot.slane %v1393, %v1397
    %v1404 = vunpack.c.l.b16 %v1389
    %v1405 = vunpack.c.l.b16 %v1390
    %v1406 = vunpack.c.l.b16 %v1391
    %v1407 = vunpack.c.l.b16 %v1392
    %v1408 = vpack.c.b16 %v1405, %v1404
    %v1409 = vpack.c.b16 %v1407, %v1406
    %v1413 = vsel %vm63, %v1387, 0
    %v1416 = vsel %vm63, %v1388, 0
    %1418 = vmatprep.subr.bf16.mxu0 0
    %1419 = vmatpush1.bf16.msra.mxu0 0
    %1420 = vmatprep.subr.bf16.mxu0 0
    %1421 = vmatpush1.bf16.msra.mxu0 0
    %1422 = vmatprep.subr.bf16.mxu0 0
    %1423 = vmatpush1.bf16.msra.mxu0 0
    %1424 = vmatprep.subr.bf16.mxu0 0
    %1425 = vmatpush1.bf16.msra.mxu0 0
    %1426 = vmatprep.subr.bf16.mxu0 0
    %1427 = vmatpush1.bf16.msra.mxu0 0
    %1428 = vmatprep.subr.bf16.mxu0 0
    %1429 = vmatpush1.bf16.msra.mxu0 0
    %1430 = vmatprep.subr.bf16.mxu0 0
    %1431 = vmatpush1.bf16.msra.mxu0 %v1409
    %1432 = vmatprep.subr.bf16.mxu0 0
    %1433 = vmatpush1.bf16.msra.mxu0 %v1408
    %1434 = vmatprep.subr.bf16.mxu0 0
    %1435 = vmatpush2.bf16.msra.mxu0 0
    %1436 = vmatprep.subr.bf16.mxu0 0
    %1437 = vmatpush2.bf16.msra.mxu0 0
    %1438 = vmatprep.subr.bf16.mxu0 0
    %1439 = vmatpush2.bf16.msra.mxu0 0
    %1440 = vmatprep.subr.bf16.mxu0 0
    %1441 = vmatpush2.bf16.msra.mxu0 0
    %1442 = vmatprep.subr.bf16.mxu0 0
    %1443 = vmatpush2.bf16.msra.mxu0 0
    %1444 = vmatprep.subr.bf16.mxu0 0
    %1445 = vmatpush2.bf16.msra.mxu0 0
    %1446 = vmatprep.subr.bf16.mxu0 0
    %1447 = vmatpush2.bf16.msra.mxu0 0
    %1448 = vmatprep.subr.bf16.mxu0 0
    %1449 = vmatpush2.bf16.msra.mxu0 0
    %1450 = vmatprep.mubr.bf16.mxu0 0
    %1451 = vmatmul.mubr.bf16.gmra.mxu0 %v1413
    %v1452 = vpop.f32.mrf.mxu0
    %v1453 = vadd.f32 %v1398, %v1452
    %v1454 = vpop.f32.mrf.mxu0
    %v1455 = vpop.f32.mrf.mxu0
    %v1456 = vadd.f32 %v1398, %v1455
    %v1457 = vpop.f32.mrf.mxu0
    %1458 = vmatprep.mubr.bf16.mxu0 0
    %1459 = vmatmul.mubr.bf16.gmra.mxu0 %v1416
    %v1460 = vpop.f32.mrf.mxu0
    %v1461 = vadd.f32 %v1398, %v1460
    %v1462 = vpop.f32.mrf.mxu0
    %v1463 = vpop.f32.mrf.mxu0
    %v1464 = vpop.f32.mrf.mxu0
    %1465 = vdwg.mxu0
    %1466 = vst.msk [vmem:[#allocation2] sm:$0xff] %vm604, %v1453
    %1467 = vst.msk [vmem:[#allocation2 + $0x8] sm:$0xff] %vm604, %v1456
    %vm1468 = vcmask 519168
    %1469 = vst.msk [vmem:[#allocation2 + $0x10] sm:$0xf] %vm1468, %v1461
    // Predicated region
    $region38: #{encode.1} parent=1 // pred_check
      _
    $region39: #{encode.1} parent=1 // pred_check_branch
      %1471 = sbr.rel (0) target = $region41
    $region40: #{encode.1} parent=1 // pred_region
      %s1473 = ssub.s32 384, 384
      %1474 = vsyncadd [#allocation3], %s1473
      %s1475 = sshll.u32 [#allocation2], 4
      %s1476 = int_to_ptr.vmem [resolvable:$true] %s1475
      %1481 = dma.vmem_to_hbm [thread:$0]  %s1476, 384, %s9, [#allocation3], 128, 128, 8
    $region41: #{encode.1} parent=1 // pred_fallthru
      _
    // Predicated region
    $region42: #{encode.1} parent=1 // pred_check
      _
    $region43: #{encode.1} parent=1 // pred_check_branch
      %1483 = sbr.rel (0) target = $region45
    $region44: #{encode.1} parent=1 // pred_region
      %1484 = dma.done [#allocation3], 384
    $region45: #{encode.1} parent=1 // pred_fallthru
      _
    %1485 = vsyncpa [#allocation3], 1

</llo_original>
